<compile_context>
chip_gen: v7x
topology: tpu7x:2x2x1
jax: 0.10.0
libtpu: 0.0.40
codegen_flags: <defaults>
</compile_context>

<pallas_src>
import jax
import jax.numpy as jnp
from jax import lax
from jax.experimental import pallas as pl
from jax.experimental.pallas import tpu as pltpu

S, B, C = 7, 2, 20            # grid cells, boxes/cell, classes
CH = C + B * 5                # 30 prediction channels per cell
TCH = C + 5                   # 25 target channels the loss actually reads
CH_ALL = CH + TCH             # 55 channels in the combined slab
LANE = 128
LAMBDA_COORD = 5.0
LAMBDA_NOOBJ = 0.5
MAX_TR = 256                  # sublane-rows per tile -> up to 256*128 = 32768 cells


# --------------------------- chip introspection ---------------------------- #
def _num_tensorcores_per_chip() -> int:
    """Best-effort TensorCore count (2 only on megacore/v7x-style parts)."""
    try:
        info = pltpu.get_tpu_info()
    except Exception:
        return 1
    for name in ("num_cores", "num_tensorcores", "core_count", "tensorcore_count"):
        n = getattr(info, name, None)
        if isinstance(n, int) and 1 <= n <= 8:
            return n
    return 1


# ----------------------------- Pallas kernel ------------------------------- #
def _make_kernel(m_valid, tr, ntj):
    """m_valid: real cell count; tr: sublane-rows per tile; ntj: tiles per core."""

    def kernel(comb_ref, out_ref):
        # comb_ref: (55, tr, 128) storage dtype (bf16/f32); out_ref: (1, 8, 128) f32.
        j = pl.program_id(1)

        @pl.when(j == 0)
        def _init():
            out_ref[...] = jnp.zeros_like(out_ref)

        def ld(c):                                   # storage -> f32 compute
            return comb_ref[c].astype(jnp.float32)

        T = CH                                       # target channel offset in slab
        exists = ld(T + 20)                          # (tr, 128)

        # Target box corners / area (hoisted -- shared by both IoUs).
        tx, ty, tw, th = ld(T + 21), ld(T + 22), ld(T + 23), ld(T + 24)
        tx1 = tx - tw * 0.5
        tx2 = tx + tw * 0.5
        ty1 = ty - th * 0.5
        ty2 = ty + th * 0.5
        t_area = jnp.abs((tx2 - tx1) * (ty2 - ty1))

        def inter_union(bx, by, bw, bh):
            bx1 = bx - bw * 0.5
            bx2 = bx + bw * 0.5
            by1 = by - bh * 0.5
            by2 = by + bh * 0.5
            iw = jnp.maximum(jnp.minimum(bx2, tx2) - jnp.maximum(bx1, tx1), 0.0)
            ih = jnp.maximum(jnp.minimum(by2, ty2) - jnp.maximum(by1, ty1), 0.0)
            inter = iw * ih
            area = jnp.abs((bx2 - bx1) * (by2 - by1))
            union = area + t_area - inter + 1e-6
            return inter, union

        p_b1 = [ld(21 + k) for k in range(4)]
        p_b2 = [ld(26 + k) for k in range(4)]
        i1, u1 = inter_union(*p_b1)
        i2, u2 = inter_union(*p_b2)
        # argmax over {iou1, iou2}; ties -> box 1.  Divide-free: both unions > 0.
        best = i2 * u1 > i1 * u2                     # bool (tr, 128)

        # ---------------- box coordinate loss ---------------- #
        def sqrt_signed(v):
            sgn = jnp.where(v > 0.0, 1.0, jnp.where(v < 0.0, -1.0, 0.0))
            return sgn * jnp.sqrt(jnp.abs(v + 1e-6))

        bx = exists * jnp.where(best, p_b2[0], p_b1[0])
        by = exists * jnp.where(best, p_b2[1], p_b1[1])
        bw = exists * jnp.where(best, p_b2[2], p_b1[2])
        bh = exists * jnp.where(best, p_b2[3], p_b1[3])

        box_sq = ((bx - exists * tx) ** 2 + (by - exists * ty) ** 2
                  + (sqrt_signed(bw) - jnp.sqrt(exists * tw)) ** 2
                  + (sqrt_signed(bh) - jnp.sqrt(exists * th)) ** 2)

        # ------------- object / no-object confidence --------- #
        e2 = exists * exists
        no = 1.0 - exists
        no2 = no * no
        pconf = jnp.where(best, ld(25), ld(20))
        obj_sq = e2 * (pconf - exists) ** 2          # target conf channel == exists
        noobj_sq = no2 * ((ld(20) - exists) ** 2 + (ld(25) - exists) ** 2)

        # ---------------------- class loss -------------------- #
        cls_acc = None
        for c in range(C):
            d = ld(c) - ld(T + c)
            cls_acc = d * d if cls_acc is None else cls_acc + d * d
        cls_sq = e2 * cls_acc

        cell_loss = (LAMBDA_COORD * box_sq + obj_sq
                     + LAMBDA_NOOBJ * noobj_sq + cls_sq)

        # Mask the ragged/padded tail (wrapper zero-pads; mask keeps it exact).
        base = (pl.program_id(0) * ntj + j) * (tr * LANE)
        rows = lax.broadcasted_iota(jnp.int32, (tr, LANE), 0)
        lanes = lax.broadcasted_iota(jnp.int32, (tr, LANE), 1)
        valid = (base + rows * LANE + lanes) < m_valid
        cell_loss = jnp.where(valid, cell_loss, 0.0)

        # Per-lane partial accumulation only (no in-kernel cross-lane reduce).
        partial = cell_loss[0:8, :]
        for g in range(1, tr // 8):
            partial = partial + cell_loss[g * 8:(g + 1) * 8, :]
        out_ref[...] = out_ref[...] + partial[None, :, :]

    return kernel


# ------------------------------- Wrapper ------------------------------------ #
def yolo_loss(predictions, target, storage_dtype=jnp.bfloat16):
    """predictions: reshapeable to (-1, S, S, 30); target: (N, S, S, 30)."""
    pred = jnp.asarray(predictions, jnp.float32).reshape(-1, S, S, CH)
    tgt = jnp.asarray(target, jnp.float32).reshape(-1, S, S, CH)
    m = pred.shape[0] * S * S

    # --- tiling: big tiles, minimal padding, chip-gated core split ---------- #
    r_needed = -(-m // LANE)                               # ceil(m / 128) sublane rows
    row_g = 16 if storage_dtype == jnp.bfloat16 else 8     # native packed-row granule
    cores = min(_num_tensorcores_per_chip(), 2)
    p_split = cores if (cores > 1 and r_needed >= cores * row_g) else 1
    per_core = -(-r_needed // p_split)
    tr = min(MAX_TR, max(row_g, -(-per_core // row_g) * row_g))
    ntj = -(-per_core // tr)
    r_pad = p_split * ntj * tr
    m_pad = r_pad * LANE

    # Single fused relayout pass: trim target to 25 channels, concat with predictions,
    # cast to the (bf16) storage dtype, pad the ragged tail, go channel-major dense
    # slabs (55, r_pad, 128) so every in-kernel op is a full-occupancy (8,128) slab.
    # TODO(synk): emit channel-major bf16 directly from the model head (fold the
    # transpose into the preceding matmul output layout) to remove this pass entirely.
    comb = jnp.concatenate(
        [pred.reshape(m, CH), tgt.reshape(m, CH)[:, :TCH]], axis=1
    ).astype(storage_dtype)                                # (m, 55)
    comb = jnp.pad(comb, ((0, m_pad - m), (0, 0)))         # (m_pad, 55)
    slab = comb.T.reshape(CH_ALL, r_pad, LANE)             # (55, r_pad, 128)

    core_sem = pltpu.CORE_PARALLEL if p_split > 1 else pltpu.ARBITRARY
    out = pl.pallas_call(
        _make_kernel(m, tr, ntj),
        out_shape=jax.ShapeDtypeStruct((p_split, 8, LANE), jnp.float32),
        grid=(p_split, ntj),
        in_specs=[pl.BlockSpec((CH_ALL, tr, LANE),
                               lambda ci, j: (0, ci * ntj + j, 0))],
        out_specs=pl.BlockSpec((1, 8, LANE), lambda ci, j: (ci, 0, 0)),
        compiler_params=pltpu.CompilerParams(
            dimension_semantics=(core_sem, pltpu.ARBITRARY)),
    )(slab)
    # Tiny final cross-lane/core reduction done outside the kernel.
    return jnp.sum(out)


# ------------------------ Pure-JAX reference (check) ------------------------ #
def _iou_ref(b1, b2):
    b1x1 = b1[..., 0:1] - b1[..., 2:3] / 2
    b1y1 = b1[..., 1:2] - b1[..., 3:4] / 2
    b1x2 = b1[..., 0:1] + b1[..., 2:3] / 2
    b1y2 = b1[..., 1:2] + b1[..., 3:4] / 2
    b2x1 = b2[..., 0:1] - b2[..., 2:3] / 2
    b2y1 = b2[..., 1:2] - b2[..., 3:4] / 2
    b2x2 = b2[..., 0:1] + b2[..., 2:3] / 2
    b2y2 = b2[..., 1:2] + b2[..., 3:4] / 2
    inter = (jnp.maximum(0.0, jnp.minimum(b1x2, b2x2) - jnp.maximum(b1x1, b2x1)) *
             jnp.maximum(0.0, jnp.minimum(b1y2, b2y2) - jnp.maximum(b1y1, b2y1)))
    a1 = jnp.abs((b1x2 - b1x1) * (b1y2 - b1y1))
    a2 = jnp.abs((b2x2 - b2x1) * (b2y2 - b2y1))
    return inter / (a1 + a2 - inter + 1e-6)


def yolo_loss_ref(predictions, target):
    pred = jnp.asarray(predictions, jnp.float32).reshape(-1, S, S, CH)
    tgt = jnp.asarray(target, jnp.float32)
    iou_b1 = _iou_ref(pred[..., 21:25], tgt[..., 21:25])
    iou_b2 = _iou_ref(pred[..., 26:30], tgt[..., 21:25])
    best = (iou_b2 > iou_b1).astype(jnp.float32)
    exists = tgt[..., 20:21]
    box_pred = exists * (best * pred[..., 26:30] + (1 - best) * pred[..., 21:25])
    box_tgt = exists * tgt[..., 21:25]
    bp_wh = jnp.sign(box_pred[..., 2:4]) * jnp.sqrt(jnp.abs(box_pred[..., 2:4] + 1e-6))
    bt_wh = jnp.sqrt(box_tgt[..., 2:4])
    box_loss = (jnp.sum((box_pred[..., 0:2] - box_tgt[..., 0:2]) ** 2)
                + jnp.sum((bp_wh - bt_wh) ** 2))
    pred_conf = best * pred[..., 25:26] + (1 - best) * pred[..., 20:21]
    object_loss = jnp.sum((exists * pred_conf - exists * tgt[..., 20:21]) ** 2)
    noobj = 1 - exists
    no_obj = (jnp.sum((noobj * pred[..., 20:21] - noobj * tgt[..., 20:21]) ** 2)
              + jnp.sum((noobj * pred[..., 25:26] - noobj * tgt[..., 20:21]) ** 2))
    class_loss = jnp.sum((exists * pred[..., :20] - exists * tgt[..., :20]) ** 2)
    return LAMBDA_COORD * box_loss + object_loss + LAMBDA_NOOBJ * no_obj + class_loss


# ---------------------------------- Main ------------------------------------ #
if __name__ == "__main__":
    key = jax.random.PRNGKey(0)
    k1, k2, k3, k4 = jax.random.split(key, 4)

    N = 2
    # Predictions as they come out of the YOLOv1 head: flat (N, S*S*30).
    predictions = jax.random.normal(k1, (N, S * S * CH), dtype=jnp.float32) * 0.1
    # Target (N, S, S, 30): 20 class scores, objectness, box (x,y,w,h), 5 unused.
    classes = jax.random.uniform(k2, (N, S, S, C), dtype=jnp.float32)
    obj = jax.random.bernoulli(k3, 0.5, (N, S, S, 1)).astype(jnp.float32)
    boxes = jax.random.uniform(k4, (N, S, S, 4), dtype=jnp.float32,
                               minval=0.05, maxval=0.95)
    pad = jnp.zeros((N, S, S, 5), dtype=jnp.float32)
    target = jnp.concatenate([classes, obj, boxes, pad], axis=-1)

    loss = yolo_loss(predictions, target)          # bf16-storage fast path
    jax.block_until_ready(loss)

    # Exact check of the kernel math: reference on the same bf16-stored values.
    pred_rt = predictions.astype(jnp.bfloat16).astype(jnp.float32)
    tgt_rt = target.astype(jnp.bfloat16).astype(jnp.float32)
    ref_rt = yolo_loss_ref(pred_rt, tgt_rt)
    assert jnp.allclose(loss, ref_rt, rtol=1e-4, atol=1e-2), (loss, ref_rt)

    # Sanity check vs the full-f32 reference (only storage quantization differs).
    ref_f32 = yolo_loss_ref(predictions, target)
    assert jnp.allclose(loss, ref_f32, rtol=5e-2, atol=0.5), (loss, ref_f32)

    print("KERNEL_OK")
</pallas_src>

<mosaic_0001>
module attributes {stable_mosaic.version = 11 : i64} {
  func.func @kernel(%arg0: i32, %arg1: i32, %arg2: memref<55x16x128xbf16, #tpu.memory_space<vmem>>, %arg3: memref<1x8x128xf32, #tpu.memory_space<vmem>>) attributes {dimension_semantics = [#tpu.dimension_semantics<arbitrary>, #tpu.dimension_semantics<arbitrary>], iteration_bounds = array<i64: 1, 1>, scalar_prefetch = 0 : i64, scratch_operands = 0 : i64, tpu.core_type = #tpu.core_type<tc>, window_params = [{transform_indices = @transform_0, window_bounds = array<i64: 55, 16, 128>}, {transform_indices = @transform_1, window_bounds = array<i64: 1, 8, 128>}]} {
    %c0_i32 = arith.constant 0 : i32
    %0 = arith.cmpi eq, %arg1, %c0_i32 : i32
    %1 = arith.extui %0 : i1 to i32
    %c0_i32_0 = arith.constant 0 : i32
    %2 = arith.cmpi ne, %1, %c0_i32_0 : i32
    scf.if %2 {
      %cst_156 = arith.constant 0.000000e+00 : f32
      %410 = vector.broadcast %cst_156 : f32 to vector<1x8x128xf32>
      %c0_157 = arith.constant 0 : index
      %c0_158 = arith.constant 0 : index
      %c0_159 = arith.constant 0 : index
      %411 = vector.load %arg3[%c0_157, %c0_158, %c0_159] : memref<1x8x128xf32, #tpu.memory_space<vmem>>, vector<1x8x128xf32>
      tpu.vector_store %arg3[%c0_157, %c0_158, %c0_159], %410 {strides = array<i32>} : memref<1x8x128xf32, #tpu.memory_space<vmem>>, vector<1x8x128xf32>,
    } else {
    }
    %c50 = arith.constant 50 : index
    %c0 = arith.constant 0 : index
    %c0_1 = arith.constant 0 : index
    %3 = vector.load %arg2[%c50, %c0, %c0_1] : memref<55x16x128xbf16, #tpu.memory_space<vmem>>, vector<1x16x128xbf16>
    %4 = vector.shape_cast %3 : vector<1x16x128xbf16> to vector<16x128xbf16>
    %5 = arith.extf %4 : vector<16x128xbf16> to vector<16x128xf32>
    %c51 = arith.constant 51 : index
    %c0_2 = arith.constant 0 : index
    %c0_3 = arith.constant 0 : index
    %6 = vector.load %arg2[%c51, %c0_2, %c0_3] : memref<55x16x128xbf16, #tpu.memory_space<vmem>>, vector<1x16x128xbf16>
    %7 = vector.shape_cast %6 : vector<1x16x128xbf16> to vector<16x128xbf16>
    %8 = arith.extf %7 : vector<16x128xbf16> to vector<16x128xf32>
    %c52 = arith.constant 52 : index
    %c0_4 = arith.constant 0 : index
    %c0_5 = arith.constant 0 : index
    %9 = vector.load %arg2[%c52, %c0_4, %c0_5] : memref<55x16x128xbf16, #tpu.memory_space<vmem>>, vector<1x16x128xbf16>
    %10 = vector.shape_cast %9 : vector<1x16x128xbf16> to vector<16x128xbf16>
    %11 = arith.extf %10 : vector<16x128xbf16> to vector<16x128xf32>
    %c53 = arith.constant 53 : index
    %c0_6 = arith.constant 0 : index
    %c0_7 = arith.constant 0 : index
    %12 = vector.load %arg2[%c53, %c0_6, %c0_7] : memref<55x16x128xbf16, #tpu.memory_space<vmem>>, vector<1x16x128xbf16>
    %13 = vector.shape_cast %12 : vector<1x16x128xbf16> to vector<16x128xbf16>
    %14 = arith.extf %13 : vector<16x128xbf16> to vector<16x128xf32>
    %c54 = arith.constant 54 : index
    %c0_8 = arith.constant 0 : index
    %c0_9 = arith.constant 0 : index
    %15 = vector.load %arg2[%c54, %c0_8, %c0_9] : memref<55x16x128xbf16, #tpu.memory_space<vmem>>, vector<1x16x128xbf16>
    %16 = vector.shape_cast %15 : vector<1x16x128xbf16> to vector<16x128xbf16>
    %17 = arith.extf %16 : vector<16x128xbf16> to vector<16x128xf32>
    %cst = arith.constant 5.000000e-01 : f32
    %18 = vector.broadcast %cst : f32 to vector<16x128xf32>
    %19 = arith.mulf %14, %18 : vector<16x128xf32>
    %20 = arith.subf %8, %19 : vector<16x128xf32>
    %cst_10 = arith.constant 5.000000e-01 : f32
    %21 = vector.broadcast %cst_10 : f32 to vector<16x128xf32>
    %22 = arith.mulf %14, %21 : vector<16x128xf32>
    %23 = arith.addf %8, %22 : vector<16x128xf32>
    %cst_11 = arith.constant 5.000000e-01 : f32
    %24 = vector.broadcast %cst_11 : f32 to vector<16x128xf32>
    %25 = arith.mulf %17, %24 : vector<16x128xf32>
    %26 = arith.subf %11, %25 : vector<16x128xf32>
    %cst_12 = arith.constant 5.000000e-01 : f32
    %27 = vector.broadcast %cst_12 : f32 to vector<16x128xf32>
    %28 = arith.mulf %17, %27 : vector<16x128xf32>
    %29 = arith.addf %11, %28 : vector<16x128xf32>
    %30 = arith.subf %23, %20 : vector<16x128xf32>
    %31 = arith.subf %29, %26 : vector<16x128xf32>
    %32 = arith.mulf %30, %31 : vector<16x128xf32>
    %33 = math.absf %32 : vector<16x128xf32>
    %c21 = arith.constant 21 : index
    %c0_13 = arith.constant 0 : index
    %c0_14 = arith.constant 0 : index
    %34 = vector.load %arg2[%c21, %c0_13, %c0_14] : memref<55x16x128xbf16, #tpu.memory_space<vmem>>, vector<1x16x128xbf16>
    %35 = vector.shape_cast %34 : vector<1x16x128xbf16> to vector<16x128xbf16>
    %36 = arith.extf %35 : vector<16x128xbf16> to vector<16x128xf32>
    %c22 = arith.constant 22 : index
    %c0_15 = arith.constant 0 : index
    %c0_16 = arith.constant 0 : index
    %37 = vector.load %arg2[%c22, %c0_15, %c0_16] : memref<55x16x128xbf16, #tpu.memory_space<vmem>>, vector<1x16x128xbf16>
    %38 = vector.shape_cast %37 : vector<1x16x128xbf16> to vector<16x128xbf16>
    %39 = arith.extf %38 : vector<16x128xbf16> to vector<16x128xf32>
    %c23 = arith.constant 23 : index
    %c0_17 = arith.constant 0 : index
    %c0_18 = arith.constant 0 : index
    %40 = vector.load %arg2[%c23, %c0_17, %c0_18] : memref<55x16x128xbf16, #tpu.memory_space<vmem>>, vector<1x16x128xbf16>
    %41 = vector.shape_cast %40 : vector<1x16x128xbf16> to vector<16x128xbf16>
    %42 = arith.extf %41 : vector<16x128xbf16> to vector<16x128xf32>
    %c24 = arith.constant 24 : index
    %c0_19 = arith.constant 0 : index
    %c0_20 = arith.constant 0 : index
    %43 = vector.load %arg2[%c24, %c0_19, %c0_20] : memref<55x16x128xbf16, #tpu.memory_space<vmem>>, vector<1x16x128xbf16>
    %44 = vector.shape_cast %43 : vector<1x16x128xbf16> to vector<16x128xbf16>
    %45 = arith.extf %44 : vector<16x128xbf16> to vector<16x128xf32>
    %c26 = arith.constant 26 : index
    %c0_21 = arith.constant 0 : index
    %c0_22 = arith.constant 0 : index
    %46 = vector.load %arg2[%c26, %c0_21, %c0_22] : memref<55x16x128xbf16, #tpu.memory_space<vmem>>, vector<1x16x128xbf16>
    %47 = vector.shape_cast %46 : vector<1x16x128xbf16> to vector<16x128xbf16>
    %48 = arith.extf %47 : vector<16x128xbf16> to vector<16x128xf32>
    %c27 = arith.constant 27 : index
    %c0_23 = arith.constant 0 : index
    %c0_24 = arith.constant 0 : index
    %49 = vector.load %arg2[%c27, %c0_23, %c0_24] : memref<55x16x128xbf16, #tpu.memory_space<vmem>>, vector<1x16x128xbf16>
    %50 = vector.shape_cast %49 : vector<1x16x128xbf16> to vector<16x128xbf16>
    %51 = arith.extf %50 : vector<16x128xbf16> to vector<16x128xf32>
    %c28 = arith.constant 28 : index
    %c0_25 = arith.constant 0 : index
    %c0_26 = arith.constant 0 : index
    %52 = vector.load %arg2[%c28, %c0_25, %c0_26] : memref<55x16x128xbf16, #tpu.memory_space<vmem>>, vector<1x16x128xbf16>
    %53 = vector.shape_cast %52 : vector<1x16x128xbf16> to vector<16x128xbf16>
    %54 = arith.extf %53 : vector<16x128xbf16> to vector<16x128xf32>
    %c29 = arith.constant 29 : index
    %c0_27 = arith.constant 0 : index
    %c0_28 = arith.constant 0 : index
    %55 = vector.load %arg2[%c29, %c0_27, %c0_28] : memref<55x16x128xbf16, #tpu.memory_space<vmem>>, vector<1x16x128xbf16>
    %56 = vector.shape_cast %55 : vector<1x16x128xbf16> to vector<16x128xbf16>
    %57 = arith.extf %56 : vector<16x128xbf16> to vector<16x128xf32>
    %cst_29 = arith.constant 5.000000e-01 : f32
    %58 = vector.broadcast %cst_29 : f32 to vector<16x128xf32>
    %59 = arith.mulf %42, %58 : vector<16x128xf32>
    %60 = arith.subf %36, %59 : vector<16x128xf32>
    %cst_30 = arith.constant 5.000000e-01 : f32
    %61 = vector.broadcast %cst_30 : f32 to vector<16x128xf32>
    %62 = arith.mulf %42, %61 : vector<16x128xf32>
    %63 = arith.addf %36, %62 : vector<16x128xf32>
    %cst_31 = arith.constant 5.000000e-01 : f32
    %64 = vector.broadcast %cst_31 : f32 to vector<16x128xf32>
    %65 = arith.mulf %45, %64 : vector<16x128xf32>
    %66 = arith.subf %39, %65 : vector<16x128xf32>
    %cst_32 = arith.constant 5.000000e-01 : f32
    %67 = vector.broadcast %cst_32 : f32 to vector<16x128xf32>
    %68 = arith.mulf %45, %67 : vector<16x128xf32>
    %69 = arith.addf %39, %68 : vector<16x128xf32>
    %70 = arith.minimumf %63, %23 : vector<16x128xf32>
    %71 = arith.maximumf %60, %20 : vector<16x128xf32>
    %72 = arith.subf %70, %71 : vector<16x128xf32>
    %cst_33 = arith.constant 0.000000e+00 : f32
    %73 = vector.broadcast %cst_33 : f32 to vector<16x128xf32>
    %74 = arith.maximumf %72, %73 : vector<16x128xf32>
    %75 = arith.minimumf %69, %29 : vector<16x128xf32>
    %76 = arith.maximumf %66, %26 : vector<16x128xf32>
    %77 = arith.subf %75, %76 : vector<16x128xf32>
    %cst_34 = arith.constant 0.000000e+00 : f32
    %78 = vector.broadcast %cst_34 : f32 to vector<16x128xf32>
    %79 = arith.maximumf %77, %78 : vector<16x128xf32>
    %80 = arith.mulf %74, %79 : vector<16x128xf32>
    %81 = arith.subf %63, %60 : vector<16x128xf32>
    %82 = arith.subf %69, %66 : vector<16x128xf32>
    %83 = arith.mulf %81, %82 : vector<16x128xf32>
    %84 = math.absf %83 : vector<16x128xf32>
    %85 = arith.addf %84, %33 : vector<16x128xf32>
    %86 = arith.subf %85, %80 : vector<16x128xf32>
    %cst_35 = arith.constant 9.99999997E-7 : f32
    %87 = vector.broadcast %cst_35 : f32 to vector<16x128xf32>
    %88 = arith.addf %86, %87 : vector<16x128xf32>
    %cst_36 = arith.constant 5.000000e-01 : f32
    %89 = vector.broadcast %cst_36 : f32 to vector<16x128xf32>
    %90 = arith.mulf %54, %89 : vector<16x128xf32>
    %91 = arith.subf %48, %90 : vector<16x128xf32>
    %cst_37 = arith.constant 5.000000e-01 : f32
    %92 = vector.broadcast %cst_37 : f32 to vector<16x128xf32>
    %93 = arith.mulf %54, %92 : vector<16x128xf32>
    %94 = arith.addf %48, %93 : vector<16x128xf32>
    %cst_38 = arith.constant 5.000000e-01 : f32
    %95 = vector.broadcast %cst_38 : f32 to vector<16x128xf32>
    %96 = arith.mulf %57, %95 : vector<16x128xf32>
    %97 = arith.subf %51, %96 : vector<16x128xf32>
    %cst_39 = arith.constant 5.000000e-01 : f32
    %98 = vector.broadcast %cst_39 : f32 to vector<16x128xf32>
    %99 = arith.mulf %57, %98 : vector<16x128xf32>
    %100 = arith.addf %51, %99 : vector<16x128xf32>
    %101 = arith.minimumf %94, %23 : vector<16x128xf32>
    %102 = arith.maximumf %91, %20 : vector<16x128xf32>
    %103 = arith.subf %101, %102 : vector<16x128xf32>
    %cst_40 = arith.constant 0.000000e+00 : f32
    %104 = vector.broadcast %cst_40 : f32 to vector<16x128xf32>
    %105 = arith.maximumf %103, %104 : vector<16x128xf32>
    %106 = arith.minimumf %100, %29 : vector<16x128xf32>
    %107 = arith.maximumf %97, %26 : vector<16x128xf32>
    %108 = arith.subf %106, %107 : vector<16x128xf32>
    %cst_41 = arith.constant 0.000000e+00 : f32
    %109 = vector.broadcast %cst_41 : f32 to vector<16x128xf32>
    %110 = arith.maximumf %108, %109 : vector<16x128xf32>
    %111 = arith.mulf %105, %110 : vector<16x128xf32>
    %112 = arith.subf %94, %91 : vector<16x128xf32>
    %113 = arith.subf %100, %97 : vector<16x128xf32>
    %114 = arith.mulf %112, %113 : vector<16x128xf32>
    %115 = math.absf %114 : vector<16x128xf32>
    %116 = arith.addf %115, %33 : vector<16x128xf32>
    %117 = arith.subf %116, %111 : vector<16x128xf32>
    %cst_42 = arith.constant 9.99999997E-7 : f32
    %118 = vector.broadcast %cst_42 : f32 to vector<16x128xf32>
    %119 = arith.addf %117, %118 : vector<16x128xf32>
    %120 = arith.mulf %111, %88 : vector<16x128xf32>
    %121 = arith.mulf %80, %119 : vector<16x128xf32>
    %122 = arith.cmpf ogt, %120, %121 : vector<16x128xf32>
    %123 = arith.select %122, %48, %36 : vector<16x128xi1>, vector<16x128xf32>
    %124 = arith.mulf %5, %123 : vector<16x128xf32>
    %125 = arith.select %122, %51, %39 : vector<16x128xi1>, vector<16x128xf32>
    %126 = arith.mulf %5, %125 : vector<16x128xf32>
    %127 = arith.select %122, %54, %42 : vector<16x128xi1>, vector<16x128xf32>
    %128 = arith.mulf %5, %127 : vector<16x128xf32>
    %129 = arith.select %122, %57, %45 : vector<16x128xi1>, vector<16x128xf32>
    %130 = arith.mulf %5, %129 : vector<16x128xf32>
    %131 = arith.mulf %5, %8 : vector<16x128xf32>
    %132 = arith.subf %124, %131 : vector<16x128xf32>
    %133 = arith.mulf %132, %132 : vector<16x128xf32>
    %134 = arith.mulf %5, %11 : vector<16x128xf32>
    %135 = arith.subf %126, %134 : vector<16x128xf32>
    %136 = arith.mulf %135, %135 : vector<16x128xf32>
    %137 = arith.addf %133, %136 : vector<16x128xf32>
    %cst_43 = arith.constant 0.000000e+00 : f32
    %138 = vector.broadcast %cst_43 : f32 to vector<16x128xf32>
    %139 = arith.cmpf ogt, %128, %138 : vector<16x128xf32>
    %cst_44 = arith.constant 0.000000e+00 : f32
    %140 = vector.broadcast %cst_44 : f32 to vector<16x128xf32>
    %141 = arith.cmpf olt, %128, %140 : vector<16x128xf32>
    %cst_45 = arith.constant -1.000000e+00 : f32
    %cst_46 = arith.constant 0.000000e+00 : f32
    %142 = vector.broadcast %cst_45 : f32 to vector<16x128xf32>
    %143 = vector.broadcast %cst_46 : f32 to vector<16x128xf32>
    %144 = arith.select %141, %142, %143 : vector<16x128xi1>, vector<16x128xf32>
    %cst_47 = arith.constant 1.000000e+00 : f32
    %145 = vector.broadcast %cst_47 : f32 to vector<16x128xf32>
    %146 = arith.select %139, %145, %144 : vector<16x128xi1>, vector<16x128xf32>
    %cst_48 = arith.constant 9.99999997E-7 : f32
    %147 = vector.broadcast %cst_48 : f32 to vector<16x128xf32>
    %148 = arith.addf %128, %147 : vector<16x128xf32>
    %149 = math.absf %148 : vector<16x128xf32>
    %150 = math.sqrt %149 : vector<16x128xf32>
    %151 = arith.mulf %146, %150 : vector<16x128xf32>
    %152 = arith.mulf %5, %14 : vector<16x128xf32>
    %153 = math.sqrt %152 : vector<16x128xf32>
    %154 = arith.subf %151, %153 : vector<16x128xf32>
    %155 = arith.mulf %154, %154 : vector<16x128xf32>
    %156 = arith.addf %137, %155 : vector<16x128xf32>
    %cst_49 = arith.constant 0.000000e+00 : f32
    %157 = vector.broadcast %cst_49 : f32 to vector<16x128xf32>
    %158 = arith.cmpf ogt, %130, %157 : vector<16x128xf32>
    %cst_50 = arith.constant 0.000000e+00 : f32
    %159 = vector.broadcast %cst_50 : f32 to vector<16x128xf32>
    %160 = arith.cmpf olt, %130, %159 : vector<16x128xf32>
    %cst_51 = arith.constant -1.000000e+00 : f32
    %cst_52 = arith.constant 0.000000e+00 : f32
    %161 = vector.broadcast %cst_51 : f32 to vector<16x128xf32>
    %162 = vector.broadcast %cst_52 : f32 to vector<16x128xf32>
    %163 = arith.select %160, %161, %162 : vector<16x128xi1>, vector<16x128xf32>
    %cst_53 = arith.constant 1.000000e+00 : f32
    %164 = vector.broadcast %cst_53 : f32 to vector<16x128xf32>
    %165 = arith.select %158, %164, %163 : vector<16x128xi1>, vector<16x128xf32>
    %cst_54 = arith.constant 9.99999997E-7 : f32
    %166 = vector.broadcast %cst_54 : f32 to vector<16x128xf32>
    %167 = arith.addf %130, %166 : vector<16x128xf32>
    %168 = math.absf %167 : vector<16x128xf32>
    %169 = math.sqrt %168 : vector<16x128xf32>
    %170 = arith.mulf %165, %169 : vector<16x128xf32>
    %171 = arith.mulf %5, %17 : vector<16x128xf32>
    %172 = math.sqrt %171 : vector<16x128xf32>
    %173 = arith.subf %170, %172 : vector<16x128xf32>
    %174 = arith.mulf %173, %173 : vector<16x128xf32>
    %175 = arith.addf %156, %174 : vector<16x128xf32>
    %176 = arith.mulf %5, %5 : vector<16x128xf32>
    %cst_55 = arith.constant 1.000000e+00 : f32
    %177 = vector.broadcast %cst_55 : f32 to vector<16x128xf32>
    %178 = arith.subf %177, %5 : vector<16x128xf32>
    %179 = arith.mulf %178, %178 : vector<16x128xf32>
    %c25 = arith.constant 25 : index
    %c0_56 = arith.constant 0 : index
    %c0_57 = arith.constant 0 : index
    %180 = vector.load %arg2[%c25, %c0_56, %c0_57] : memref<55x16x128xbf16, #tpu.memory_space<vmem>>, vector<1x16x128xbf16>
    %181 = vector.shape_cast %180 : vector<1x16x128xbf16> to vector<16x128xbf16>
    %182 = arith.extf %181 : vector<16x128xbf16> to vector<16x128xf32>
    %c20 = arith.constant 20 : index
    %c0_58 = arith.constant 0 : index
    %c0_59 = arith.constant 0 : index
    %183 = vector.load %arg2[%c20, %c0_58, %c0_59] : memref<55x16x128xbf16, #tpu.memory_space<vmem>>, vector<1x16x128xbf16>
    %184 = vector.shape_cast %183 : vector<1x16x128xbf16> to vector<16x128xbf16>
    %185 = arith.extf %184 : vector<16x128xbf16> to vector<16x128xf32>
    %186 = arith.select %122, %182, %185 : vector<16x128xi1>, vector<16x128xf32>
    %187 = arith.subf %186, %5 : vector<16x128xf32>
    %188 = arith.mulf %187, %187 : vector<16x128xf32>
    %189 = arith.mulf %176, %188 : vector<16x128xf32>
    %c20_60 = arith.constant 20 : index
    %c0_61 = arith.constant 0 : index
    %c0_62 = arith.constant 0 : index
    %190 = vector.load %arg2[%c20_60, %c0_61, %c0_62] : memref<55x16x128xbf16, #tpu.memory_space<vmem>>, vector<1x16x128xbf16>
    %191 = vector.shape_cast %190 : vector<1x16x128xbf16> to vector<16x128xbf16>
    %192 = arith.extf %191 : vector<16x128xbf16> to vector<16x128xf32>
    %193 = arith.subf %192, %5 : vector<16x128xf32>
    %194 = arith.mulf %193, %193 : vector<16x128xf32>
    %c25_63 = arith.constant 25 : index
    %c0_64 = arith.constant 0 : index
    %c0_65 = arith.constant 0 : index
    %195 = vector.load %arg2[%c25_63, %c0_64, %c0_65] : memref<55x16x128xbf16, #tpu.memory_space<vmem>>, vector<1x16x128xbf16>
    %196 = vector.shape_cast %195 : vector<1x16x128xbf16> to vector<16x128xbf16>
    %197 = arith.extf %196 : vector<16x128xbf16> to vector<16x128xf32>
    %198 = arith.subf %197, %5 : vector<16x128xf32>
    %199 = arith.mulf %198, %198 : vector<16x128xf32>
    %200 = arith.addf %194, %199 : vector<16x128xf32>
    %201 = arith.mulf %179, %200 : vector<16x128xf32>
    %c0_66 = arith.constant 0 : index
    %c0_67 = arith.constant 0 : index
    %c0_68 = arith.constant 0 : index
    %202 = vector.load %arg2[%c0_66, %c0_67, %c0_68] : memref<55x16x128xbf16, #tpu.memory_space<vmem>>, vector<1x16x128xbf16>
    %203 = vector.shape_cast %202 : vector<1x16x128xbf16> to vector<16x128xbf16>
    %204 = arith.extf %203 : vector<16x128xbf16> to vector<16x128xf32>
    %c30 = arith.constant 30 : index
    %c0_69 = arith.constant 0 : index
    %c0_70 = arith.constant 0 : index
    %205 = vector.load %arg2[%c30, %c0_69, %c0_70] : memref<55x16x128xbf16, #tpu.memory_space<vmem>>, vector<1x16x128xbf16>
    %206 = vector.shape_cast %205 : vector<1x16x128xbf16> to vector<16x128xbf16>
    %207 = arith.extf %206 : vector<16x128xbf16> to vector<16x128xf32>
    %208 = arith.subf %204, %207 : vector<16x128xf32>
    %209 = arith.mulf %208, %208 : vector<16x128xf32>
    %c1 = arith.constant 1 : index
    %c0_71 = arith.constant 0 : index
    %c0_72 = arith.constant 0 : index
    %210 = vector.load %arg2[%c1, %c0_71, %c0_72] : memref<55x16x128xbf16, #tpu.memory_space<vmem>>, vector<1x16x128xbf16>
    %211 = vector.shape_cast %210 : vector<1x16x128xbf16> to vector<16x128xbf16>
    %212 = arith.extf %211 : vector<16x128xbf16> to vector<16x128xf32>
    %c31 = arith.constant 31 : index
    %c0_73 = arith.constant 0 : index
    %c0_74 = arith.constant 0 : index
    %213 = vector.load %arg2[%c31, %c0_73, %c0_74] : memref<55x16x128xbf16, #tpu.memory_space<vmem>>, vector<1x16x128xbf16>
    %214 = vector.shape_cast %213 : vector<1x16x128xbf16> to vector<16x128xbf16>
    %215 = arith.extf %214 : vector<16x128xbf16> to vector<16x128xf32>
    %216 = arith.subf %212, %215 : vector<16x128xf32>
    %217 = arith.mulf %216, %216 : vector<16x128xf32>
    %218 = arith.addf %209, %217 : vector<16x128xf32>
    %c2 = arith.constant 2 : index
    %c0_75 = arith.constant 0 : index
    %c0_76 = arith.constant 0 : index
    %219 = vector.load %arg2[%c2, %c0_75, %c0_76] : memref<55x16x128xbf16, #tpu.memory_space<vmem>>, vector<1x16x128xbf16>
    %220 = vector.shape_cast %219 : vector<1x16x128xbf16> to vector<16x128xbf16>
    %221 = arith.extf %220 : vector<16x128xbf16> to vector<16x128xf32>
    %c32 = arith.constant 32 : index
    %c0_77 = arith.constant 0 : index
    %c0_78 = arith.constant 0 : index
    %222 = vector.load %arg2[%c32, %c0_77, %c0_78] : memref<55x16x128xbf16, #tpu.memory_space<vmem>>, vector<1x16x128xbf16>
    %223 = vector.shape_cast %222 : vector<1x16x128xbf16> to vector<16x128xbf16>
    %224 = arith.extf %223 : vector<16x128xbf16> to vector<16x128xf32>
    %225 = arith.subf %221, %224 : vector<16x128xf32>
    %226 = arith.mulf %225, %225 : vector<16x128xf32>
    %227 = arith.addf %218, %226 : vector<16x128xf32>
    %c3 = arith.constant 3 : index
    %c0_79 = arith.constant 0 : index
    %c0_80 = arith.constant 0 : index
    %228 = vector.load %arg2[%c3, %c0_79, %c0_80] : memref<55x16x128xbf16, #tpu.memory_space<vmem>>, vector<1x16x128xbf16>
    %229 = vector.shape_cast %228 : vector<1x16x128xbf16> to vector<16x128xbf16>
    %230 = arith.extf %229 : vector<16x128xbf16> to vector<16x128xf32>
    %c33 = arith.constant 33 : index
    %c0_81 = arith.constant 0 : index
    %c0_82 = arith.constant 0 : index
    %231 = vector.load %arg2[%c33, %c0_81, %c0_82] : memref<55x16x128xbf16, #tpu.memory_space<vmem>>, vector<1x16x128xbf16>
    %232 = vector.shape_cast %231 : vector<1x16x128xbf16> to vector<16x128xbf16>
    %233 = arith.extf %232 : vector<16x128xbf16> to vector<16x128xf32>
    %234 = arith.subf %230, %233 : vector<16x128xf32>
    %235 = arith.mulf %234, %234 : vector<16x128xf32>
    %236 = arith.addf %227, %235 : vector<16x128xf32>
    %c4 = arith.constant 4 : index
    %c0_83 = arith.constant 0 : index
    %c0_84 = arith.constant 0 : index
    %237 = vector.load %arg2[%c4, %c0_83, %c0_84] : memref<55x16x128xbf16, #tpu.memory_space<vmem>>, vector<1x16x128xbf16>
    %238 = vector.shape_cast %237 : vector<1x16x128xbf16> to vector<16x128xbf16>
    %239 = arith.extf %238 : vector<16x128xbf16> to vector<16x128xf32>
    %c34 = arith.constant 34 : index
    %c0_85 = arith.constant 0 : index
    %c0_86 = arith.constant 0 : index
    %240 = vector.load %arg2[%c34, %c0_85, %c0_86] : memref<55x16x128xbf16, #tpu.memory_space<vmem>>, vector<1x16x128xbf16>
    %241 = vector.shape_cast %240 : vector<1x16x128xbf16> to vector<16x128xbf16>
    %242 = arith.extf %241 : vector<16x128xbf16> to vector<16x128xf32>
    %243 = arith.subf %239, %242 : vector<16x128xf32>
    %244 = arith.mulf %243, %243 : vector<16x128xf32>
    %245 = arith.addf %236, %244 : vector<16x128xf32>
    %c5 = arith.constant 5 : index
    %c0_87 = arith.constant 0 : index
    %c0_88 = arith.constant 0 : index
    %246 = vector.load %arg2[%c5, %c0_87, %c0_88] : memref<55x16x128xbf16, #tpu.memory_space<vmem>>, vector<1x16x128xbf16>
    %247 = vector.shape_cast %246 : vector<1x16x128xbf16> to vector<16x128xbf16>
    %248 = arith.extf %247 : vector<16x128xbf16> to vector<16x128xf32>
    %c35 = arith.constant 35 : index
    %c0_89 = arith.constant 0 : index
    %c0_90 = arith.constant 0 : index
    %249 = vector.load %arg2[%c35, %c0_89, %c0_90] : memref<55x16x128xbf16, #tpu.memory_space<vmem>>, vector<1x16x128xbf16>
    %250 = vector.shape_cast %249 : vector<1x16x128xbf16> to vector<16x128xbf16>
    %251 = arith.extf %250 : vector<16x128xbf16> to vector<16x128xf32>
    %252 = arith.subf %248, %251 : vector<16x128xf32>
    %253 = arith.mulf %252, %252 : vector<16x128xf32>
    %254 = arith.addf %245, %253 : vector<16x128xf32>
    %c6 = arith.constant 6 : index
    %c0_91 = arith.constant 0 : index
    %c0_92 = arith.constant 0 : index
    %255 = vector.load %arg2[%c6, %c0_91, %c0_92] : memref<55x16x128xbf16, #tpu.memory_space<vmem>>, vector<1x16x128xbf16>
    %256 = vector.shape_cast %255 : vector<1x16x128xbf16> to vector<16x128xbf16>
    %257 = arith.extf %256 : vector<16x128xbf16> to vector<16x128xf32>
    %c36 = arith.constant 36 : index
    %c0_93 = arith.constant 0 : index
    %c0_94 = arith.constant 0 : index
    %258 = vector.load %arg2[%c36, %c0_93, %c0_94] : memref<55x16x128xbf16, #tpu.memory_space<vmem>>, vector<1x16x128xbf16>
    %259 = vector.shape_cast %258 : vector<1x16x128xbf16> to vector<16x128xbf16>
    %260 = arith.extf %259 : vector<16x128xbf16> to vector<16x128xf32>
    %261 = arith.subf %257, %260 : vector<16x128xf32>
    %262 = arith.mulf %261, %261 : vector<16x128xf32>
    %263 = arith.addf %254, %262 : vector<16x128xf32>
    %c7 = arith.constant 7 : index
    %c0_95 = arith.constant 0 : index
    %c0_96 = arith.constant 0 : index
    %264 = vector.load %arg2[%c7, %c0_95, %c0_96] : memref<55x16x128xbf16, #tpu.memory_space<vmem>>, vector<1x16x128xbf16>
    %265 = vector.shape_cast %264 : vector<1x16x128xbf16> to vector<16x128xbf16>
    %266 = arith.extf %265 : vector<16x128xbf16> to vector<16x128xf32>
    %c37 = arith.constant 37 : index
    %c0_97 = arith.constant 0 : index
    %c0_98 = arith.constant 0 : index
    %267 = vector.load %arg2[%c37, %c0_97, %c0_98] : memref<55x16x128xbf16, #tpu.memory_space<vmem>>, vector<1x16x128xbf16>
    %268 = vector.shape_cast %267 : vector<1x16x128xbf16> to vector<16x128xbf16>
    %269 = arith.extf %268 : vector<16x128xbf16> to vector<16x128xf32>
    %270 = arith.subf %266, %269 : vector<16x128xf32>
    %271 = arith.mulf %270, %270 : vector<16x128xf32>
    %272 = arith.addf %263, %271 : vector<16x128xf32>
    %c8 = arith.constant 8 : index
    %c0_99 = arith.constant 0 : index
    %c0_100 = arith.constant 0 : index
    %273 = vector.load %arg2[%c8, %c0_99, %c0_100] : memref<55x16x128xbf16, #tpu.memory_space<vmem>>, vector<1x16x128xbf16>
    %274 = vector.shape_cast %273 : vector<1x16x128xbf16> to vector<16x128xbf16>
    %275 = arith.extf %274 : vector<16x128xbf16> to vector<16x128xf32>
    %c38 = arith.constant 38 : index
    %c0_101 = arith.constant 0 : index
    %c0_102 = arith.constant 0 : index
    %276 = vector.load %arg2[%c38, %c0_101, %c0_102] : memref<55x16x128xbf16, #tpu.memory_space<vmem>>, vector<1x16x128xbf16>
    %277 = vector.shape_cast %276 : vector<1x16x128xbf16> to vector<16x128xbf16>
    %278 = arith.extf %277 : vector<16x128xbf16> to vector<16x128xf32>
    %279 = arith.subf %275, %278 : vector<16x128xf32>
    %280 = arith.mulf %279, %279 : vector<16x128xf32>
    %281 = arith.addf %272, %280 : vector<16x128xf32>
    %c9 = arith.constant 9 : index
    %c0_103 = arith.constant 0 : index
    %c0_104 = arith.constant 0 : index
    %282 = vector.load %arg2[%c9, %c0_103, %c0_104] : memref<55x16x128xbf16, #tpu.memory_space<vmem>>, vector<1x16x128xbf16>
    %283 = vector.shape_cast %282 : vector<1x16x128xbf16> to vector<16x128xbf16>
    %284 = arith.extf %283 : vector<16x128xbf16> to vector<16x128xf32>
    %c39 = arith.constant 39 : index
    %c0_105 = arith.constant 0 : index
    %c0_106 = arith.constant 0 : index
    %285 = vector.load %arg2[%c39, %c0_105, %c0_106] : memref<55x16x128xbf16, #tpu.memory_space<vmem>>, vector<1x16x128xbf16>
    %286 = vector.shape_cast %285 : vector<1x16x128xbf16> to vector<16x128xbf16>
    %287 = arith.extf %286 : vector<16x128xbf16> to vector<16x128xf32>
    %288 = arith.subf %284, %287 : vector<16x128xf32>
    %289 = arith.mulf %288, %288 : vector<16x128xf32>
    %290 = arith.addf %281, %289 : vector<16x128xf32>
    %c10 = arith.constant 10 : index
    %c0_107 = arith.constant 0 : index
    %c0_108 = arith.constant 0 : index
    %291 = vector.load %arg2[%c10, %c0_107, %c0_108] : memref<55x16x128xbf16, #tpu.memory_space<vmem>>, vector<1x16x128xbf16>
    %292 = vector.shape_cast %291 : vector<1x16x128xbf16> to vector<16x128xbf16>
    %293 = arith.extf %292 : vector<16x128xbf16> to vector<16x128xf32>
    %c40 = arith.constant 40 : index
    %c0_109 = arith.constant 0 : index
    %c0_110 = arith.constant 0 : index
    %294 = vector.load %arg2[%c40, %c0_109, %c0_110] : memref<55x16x128xbf16, #tpu.memory_space<vmem>>, vector<1x16x128xbf16>
    %295 = vector.shape_cast %294 : vector<1x16x128xbf16> to vector<16x128xbf16>
    %296 = arith.extf %295 : vector<16x128xbf16> to vector<16x128xf32>
    %297 = arith.subf %293, %296 : vector<16x128xf32>
    %298 = arith.mulf %297, %297 : vector<16x128xf32>
    %299 = arith.addf %290, %298 : vector<16x128xf32>
    %c11 = arith.constant 11 : index
    %c0_111 = arith.constant 0 : index
    %c0_112 = arith.constant 0 : index
    %300 = vector.load %arg2[%c11, %c0_111, %c0_112] : memref<55x16x128xbf16, #tpu.memory_space<vmem>>, vector<1x16x128xbf16>
    %301 = vector.shape_cast %300 : vector<1x16x128xbf16> to vector<16x128xbf16>
    %302 = arith.extf %301 : vector<16x128xbf16> to vector<16x128xf32>
    %c41 = arith.constant 41 : index
    %c0_113 = arith.constant 0 : index
    %c0_114 = arith.constant 0 : index
    %303 = vector.load %arg2[%c41, %c0_113, %c0_114] : memref<55x16x128xbf16, #tpu.memory_space<vmem>>, vector<1x16x128xbf16>
    %304 = vector.shape_cast %303 : vector<1x16x128xbf16> to vector<16x128xbf16>
    %305 = arith.extf %304 : vector<16x128xbf16> to vector<16x128xf32>
    %306 = arith.subf %302, %305 : vector<16x128xf32>
    %307 = arith.mulf %306, %306 : vector<16x128xf32>
    %308 = arith.addf %299, %307 : vector<16x128xf32>
    %c12 = arith.constant 12 : index
    %c0_115 = arith.constant 0 : index
    %c0_116 = arith.constant 0 : index
    %309 = vector.load %arg2[%c12, %c0_115, %c0_116] : memref<55x16x128xbf16, #tpu.memory_space<vmem>>, vector<1x16x128xbf16>
    %310 = vector.shape_cast %309 : vector<1x16x128xbf16> to vector<16x128xbf16>
    %311 = arith.extf %310 : vector<16x128xbf16> to vector<16x128xf32>
    %c42 = arith.constant 42 : index
    %c0_117 = arith.constant 0 : index
    %c0_118 = arith.constant 0 : index
    %312 = vector.load %arg2[%c42, %c0_117, %c0_118] : memref<55x16x128xbf16, #tpu.memory_space<vmem>>, vector<1x16x128xbf16>
    %313 = vector.shape_cast %312 : vector<1x16x128xbf16> to vector<16x128xbf16>
    %314 = arith.extf %313 : vector<16x128xbf16> to vector<16x128xf32>
    %315 = arith.subf %311, %314 : vector<16x128xf32>
    %316 = arith.mulf %315, %315 : vector<16x128xf32>
    %317 = arith.addf %308, %316 : vector<16x128xf32>
    %c13 = arith.constant 13 : index
    %c0_119 = arith.constant 0 : index
    %c0_120 = arith.constant 0 : index
    %318 = vector.load %arg2[%c13, %c0_119, %c0_120] : memref<55x16x128xbf16, #tpu.memory_space<vmem>>, vector<1x16x128xbf16>
    %319 = vector.shape_cast %318 : vector<1x16x128xbf16> to vector<16x128xbf16>
    %320 = arith.extf %319 : vector<16x128xbf16> to vector<16x128xf32>
    %c43 = arith.constant 43 : index
    %c0_121 = arith.constant 0 : index
    %c0_122 = arith.constant 0 : index
    %321 = vector.load %arg2[%c43, %c0_121, %c0_122] : memref<55x16x128xbf16, #tpu.memory_space<vmem>>, vector<1x16x128xbf16>
    %322 = vector.shape_cast %321 : vector<1x16x128xbf16> to vector<16x128xbf16>
    %323 = arith.extf %322 : vector<16x128xbf16> to vector<16x128xf32>
    %324 = arith.subf %320, %323 : vector<16x128xf32>
    %325 = arith.mulf %324, %324 : vector<16x128xf32>
    %326 = arith.addf %317, %325 : vector<16x128xf32>
    %c14 = arith.constant 14 : index
    %c0_123 = arith.constant 0 : index
    %c0_124 = arith.constant 0 : index
    %327 = vector.load %arg2[%c14, %c0_123, %c0_124] : memref<55x16x128xbf16, #tpu.memory_space<vmem>>, vector<1x16x128xbf16>
    %328 = vector.shape_cast %327 : vector<1x16x128xbf16> to vector<16x128xbf16>
    %329 = arith.extf %328 : vector<16x128xbf16> to vector<16x128xf32>
    %c44 = arith.constant 44 : index
    %c0_125 = arith.constant 0 : index
    %c0_126 = arith.constant 0 : index
    %330 = vector.load %arg2[%c44, %c0_125, %c0_126] : memref<55x16x128xbf16, #tpu.memory_space<vmem>>, vector<1x16x128xbf16>
    %331 = vector.shape_cast %330 : vector<1x16x128xbf16> to vector<16x128xbf16>
    %332 = arith.extf %331 : vector<16x128xbf16> to vector<16x128xf32>
    %333 = arith.subf %329, %332 : vector<16x128xf32>
    %334 = arith.mulf %333, %333 : vector<16x128xf32>
    %335 = arith.addf %326, %334 : vector<16x128xf32>
    %c15 = arith.constant 15 : index
    %c0_127 = arith.constant 0 : index
    %c0_128 = arith.constant 0 : index
    %336 = vector.load %arg2[%c15, %c0_127, %c0_128] : memref<55x16x128xbf16, #tpu.memory_space<vmem>>, vector<1x16x128xbf16>
    %337 = vector.shape_cast %336 : vector<1x16x128xbf16> to vector<16x128xbf16>
    %338 = arith.extf %337 : vector<16x128xbf16> to vector<16x128xf32>
    %c45 = arith.constant 45 : index
    %c0_129 = arith.constant 0 : index
    %c0_130 = arith.constant 0 : index
    %339 = vector.load %arg2[%c45, %c0_129, %c0_130] : memref<55x16x128xbf16, #tpu.memory_space<vmem>>, vector<1x16x128xbf16>
    %340 = vector.shape_cast %339 : vector<1x16x128xbf16> to vector<16x128xbf16>
    %341 = arith.extf %340 : vector<16x128xbf16> to vector<16x128xf32>
    %342 = arith.subf %338, %341 : vector<16x128xf32>
    %343 = arith.mulf %342, %342 : vector<16x128xf32>
    %344 = arith.addf %335, %343 : vector<16x128xf32>
    %c16 = arith.constant 16 : index
    %c0_131 = arith.constant 0 : index
    %c0_132 = arith.constant 0 : index
    %345 = vector.load %arg2[%c16, %c0_131, %c0_132] : memref<55x16x128xbf16, #tpu.memory_space<vmem>>, vector<1x16x128xbf16>
    %346 = vector.shape_cast %345 : vector<1x16x128xbf16> to vector<16x128xbf16>
    %347 = arith.extf %346 : vector<16x128xbf16> to vector<16x128xf32>
    %c46 = arith.constant 46 : index
    %c0_133 = arith.constant 0 : index
    %c0_134 = arith.constant 0 : index
    %348 = vector.load %arg2[%c46, %c0_133, %c0_134] : memref<55x16x128xbf16, #tpu.memory_space<vmem>>, vector<1x16x128xbf16>
    %349 = vector.shape_cast %348 : vector<1x16x128xbf16> to vector<16x128xbf16>
    %350 = arith.extf %349 : vector<16x128xbf16> to vector<16x128xf32>
    %351 = arith.subf %347, %350 : vector<16x128xf32>
    %352 = arith.mulf %351, %351 : vector<16x128xf32>
    %353 = arith.addf %344, %352 : vector<16x128xf32>
    %c17 = arith.constant 17 : index
    %c0_135 = arith.constant 0 : index
    %c0_136 = arith.constant 0 : index
    %354 = vector.load %arg2[%c17, %c0_135, %c0_136] : memref<55x16x128xbf16, #tpu.memory_space<vmem>>, vector<1x16x128xbf16>
    %355 = vector.shape_cast %354 : vector<1x16x128xbf16> to vector<16x128xbf16>
    %356 = arith.extf %355 : vector<16x128xbf16> to vector<16x128xf32>
    %c47 = arith.constant 47 : index
    %c0_137 = arith.constant 0 : index
    %c0_138 = arith.constant 0 : index
    %357 = vector.load %arg2[%c47, %c0_137, %c0_138] : memref<55x16x128xbf16, #tpu.memory_space<vmem>>, vector<1x16x128xbf16>
    %358 = vector.shape_cast %357 : vector<1x16x128xbf16> to vector<16x128xbf16>
    %359 = arith.extf %358 : vector<16x128xbf16> to vector<16x128xf32>
    %360 = arith.subf %356, %359 : vector<16x128xf32>
    %361 = arith.mulf %360, %360 : vector<16x128xf32>
    %362 = arith.addf %353, %361 : vector<16x128xf32>
    %c18 = arith.constant 18 : index
    %c0_139 = arith.constant 0 : index
    %c0_140 = arith.constant 0 : index
    %363 = vector.load %arg2[%c18, %c0_139, %c0_140] : memref<55x16x128xbf16, #tpu.memory_space<vmem>>, vector<1x16x128xbf16>
    %364 = vector.shape_cast %363 : vector<1x16x128xbf16> to vector<16x128xbf16>
    %365 = arith.extf %364 : vector<16x128xbf16> to vector<16x128xf32>
    %c48 = arith.constant 48 : index
    %c0_141 = arith.constant 0 : index
    %c0_142 = arith.constant 0 : index
    %366 = vector.load %arg2[%c48, %c0_141, %c0_142] : memref<55x16x128xbf16, #tpu.memory_space<vmem>>, vector<1x16x128xbf16>
    %367 = vector.shape_cast %366 : vector<1x16x128xbf16> to vector<16x128xbf16>
    %368 = arith.extf %367 : vector<16x128xbf16> to vector<16x128xf32>
    %369 = arith.subf %365, %368 : vector<16x128xf32>
    %370 = arith.mulf %369, %369 : vector<16x128xf32>
    %371 = arith.addf %362, %370 : vector<16x128xf32>
    %c19 = arith.constant 19 : index
    %c0_143 = arith.constant 0 : index
    %c0_144 = arith.constant 0 : index
    %372 = vector.load %arg2[%c19, %c0_143, %c0_144] : memref<55x16x128xbf16, #tpu.memory_space<vmem>>, vector<1x16x128xbf16>
    %373 = vector.shape_cast %372 : vector<1x16x128xbf16> to vector<16x128xbf16>
    %374 = arith.extf %373 : vector<16x128xbf16> to vector<16x128xf32>
    %c49 = arith.constant 49 : index
    %c0_145 = arith.constant 0 : index
    %c0_146 = arith.constant 0 : index
    %375 = vector.load %arg2[%c49, %c0_145, %c0_146] : memref<55x16x128xbf16, #tpu.memory_space<vmem>>, vector<1x16x128xbf16>
    %376 = vector.shape_cast %375 : vector<1x16x128xbf16> to vector<16x128xbf16>
    %377 = arith.extf %376 : vector<16x128xbf16> to vector<16x128xf32>
    %378 = arith.subf %374, %377 : vector<16x128xf32>
    %379 = arith.mulf %378, %378 : vector<16x128xf32>
    %380 = arith.addf %371, %379 : vector<16x128xf32>
    %381 = arith.mulf %176, %380 : vector<16x128xf32>
    %cst_147 = arith.constant 5.000000e+00 : f32
    %382 = vector.broadcast %cst_147 : f32 to vector<16x128xf32>
    %383 = arith.mulf %382, %175 : vector<16x128xf32>
    %384 = arith.addf %383, %189 : vector<16x128xf32>
    %cst_148 = arith.constant 5.000000e-01 : f32
    %385 = vector.broadcast %cst_148 : f32 to vector<16x128xf32>
    %386 = arith.mulf %385, %201 : vector<16x128xf32>
    %387 = arith.addf %384, %386 : vector<16x128xf32>
    %388 = arith.addf %387, %381 : vector<16x128xf32>
    %c1_i32 = arith.constant 1 : i32
    %389 = arith.muli %arg0, %c1_i32 : i32
    %390 = arith.addi %389, %arg1 : i32
    %c2048_i32 = arith.constant 2048 : i32
    %391 = arith.muli %390, %c2048_i32 : i32
    %392 = tpu.iota {dimensions = array<i32: 0>} : vector<16x128xi32>
    %393 = tpu.iota {dimensions = array<i32: 1>} : vector<16x128xi32>
    %c128_i32 = arith.constant 128 : i32
    %394 = vector.broadcast %c128_i32 : i32 to vector<16x128xi32>
    %395 = arith.muli %392, %394 : vector<16x128xi32>
    %396 = vector.broadcast %391 : i32 to vector<16x128xi32>
    %397 = arith.addi %396, %395 : vector<16x128xi32>
    %398 = arith.addi %397, %393 : vector<16x128xi32>
    %c98_i32 = arith.constant 98 : i32
    %399 = vector.broadcast %c98_i32 : i32 to vector<16x128xi32>
    %400 = arith.cmpi slt, %398, %399 : vector<16x128xi32>
    %cst_149 = arith.constant 0.000000e+00 : f32
    %401 = vector.broadcast %cst_149 : f32 to vector<16x128xf32>
    %402 = arith.select %400, %388, %401 : vector<16x128xi1>, vector<16x128xf32>
    %403 = vector.extract_strided_slice %402 {offsets = [0, 0], sizes = [8, 128], strides = [1, 1]} : vector<16x128xf32> to vector<8x128xf32>
    %404 = vector.extract_strided_slice %402 {offsets = [8, 0], sizes = [8, 128], strides = [1, 1]} : vector<16x128xf32> to vector<8x128xf32>
    %405 = arith.addf %403, %404 : vector<8x128xf32>
    %c0_150 = arith.constant 0 : index
    %c0_151 = arith.constant 0 : index
    %c0_152 = arith.constant 0 : index
    %406 = vector.load %arg3[%c0_150, %c0_151, %c0_152] : memref<1x8x128xf32, #tpu.memory_space<vmem>>, vector<1x8x128xf32>
    %407 = vector.shape_cast %405 : vector<8x128xf32> to vector<1x8x128xf32>
    %408 = arith.addf %406, %407 : vector<1x8x128xf32>
    %c0_153 = arith.constant 0 : index
    %c0_154 = arith.constant 0 : index
    %c0_155 = arith.constant 0 : index
    %409 = vector.load %arg3[%c0_153, %c0_154, %c0_155] : memref<1x8x128xf32, #tpu.memory_space<vmem>>, vector<1x8x128xf32>
    tpu.vector_store %arg3[%c0_153, %c0_154, %c0_155], %408 {strides = array<i32>} : memref<1x8x128xf32, #tpu.memory_space<vmem>>, vector<1x8x128xf32>,
    return
  }
  func.func @transform_0(%arg0: i32, %arg1: i32) -> (i32, i32, i32) {
    %c1_i32 = arith.constant 1 : i32
    %0 = arith.muli %arg0, %c1_i32 : i32
    %1 = arith.addi %0, %arg1 : i32
    %c0_i32 = arith.constant 0 : i32
    %c0_i32_0 = arith.constant 0 : i32
    %c0_i32_1 = arith.constant 0 : i32
    return %c0_i32, %1, %c0_i32_0 : i32, i32, i32
  }
  func.func @transform_1(%arg0: i32, %arg1: i32) -> (i32, i32, i32) {
    %c0_i32 = arith.constant 0 : i32
    %c0_i32_0 = arith.constant 0 : i32
    %c0_i32_1 = arith.constant 0 : i32
    return %arg0, %c0_i32, %c0_i32_0 : i32, i32, i32
  }
}

</mosaic_0001>

<llo_original>
// kernel: tpu_custom_call.1
$region0: #{tpu_custom_call.1}
  #allocation0 [shape = 'u32[]', space=smem, size = 0x4, offset = 0x4, fixed_abs, tag = 'smem constant byte address 0x4 - core index']
  #allocation1 [shape = 'u32[144,128]{1,0:T(1,128)}', space=vmem, size = 0x12000, scoped, tag = 'internal scratch']
  %s0 = inlined_call_operand.hbm [shape: bf16[55,16,128], index: 0, kind: input, shape index: {}]
  %s1 = inlined_call_operand.hbm [shape: f32[1,8,128], index: 1, kind: output, shape index: {}]
  %s2 = sld [smem:[#allocation0]]
  $region22: #{tpu_custom_call.1} parent=0
    _
  %s4 = ssub.s32 1, %s2
  %s5 = scalar_select 0, %s4, %s2
  $region1: #{tpu_custom_call.1} parent=0
    #allocation2 [shape = 'u8[225280]{0}', space=vmem, size = 0x37000, scoped, tag = 'input window, operand 0, single buffered']
    #allocation3 [shape = 's32[1]{0}', space=sflag, size = 0x4, scoped, tag = 'scoped memory for tpu_custom_call.1']
    #allocation4 [shape = 's32[1]{0}', space=sflag, size = 0x4, scoped, tag = 'scoped memory for tpu_custom_call.1']
    #allocation5 [shape = 'u8[4096]{0}', space=vmem, size = 0x1000, scoped, tag = 'output window, operand 0, single buffered']
    %6 = vsyncpa [#allocation3], 0
    %7 = vsyncpa [#allocation4], 0
    // Predicated region
    $region2: #{tpu_custom_call.1} parent=1 // pred_check
      _
    $region3: #{tpu_custom_call.1} parent=1 // pred_check_branch
      %9 = sbr.rel (0) target = $region5
    $region4: #{tpu_custom_call.1} parent=1 // pred_region
      %s10 = sadd.s32 0, 0
      %s11 = smul.u32 2, %s10
      %s13 = ssub.s32 7040, 7040
      %14 = vsyncadd [#allocation3], %s13
      %s15 = smul.addr %s11, 64
      %s16 = scalar_lea.hbm %s0, %s15
      %s17 = sshll.u32 [#allocation2], 4
      %s18 = int_to_ptr.vmem [resolvable:$true] %s17
      %23 = dma.hbm_to_vmem [thread:$0]  %s16, 7040, %s18, [#allocation3], 64, 64, 4
    $region5: #{tpu_custom_call.1} parent=1 // pred_fallthru
      _
    // Predicated region
    $region6: #{tpu_custom_call.1} parent=1 // pred_check
      _
    $region7: #{tpu_custom_call.1} parent=1 // pred_check_branch
      %25 = sbr.rel (0) target = $region9
    $region8: #{tpu_custom_call.1} parent=1 // pred_region
      %26 = dma.done [#allocation3], 7040
    $region9: #{tpu_custom_call.1} parent=1 // pred_fallthru
      _
    %s27 = sadd.s32 0, 0
    %s28 = smul.u32 2, %s27
    %p29 = scmp.eq.s32.totalorder 0, 0
    // Predicated region
    $region10: #{tpu_custom_call.1} parent=1 // pred_check
      %p30 = pneg %p29
    $region11: #{tpu_custom_call.1} parent=1 // pred_check_branch
      %32 = sbr.rel (%p30) target = $region13
    $region12: #{tpu_custom_call.1} parent=1 // pred_region
      %33 = vst [vmem:[#allocation5] sm:$0xff] 0.0
    $region13: #{tpu_custom_call.1} parent=1 // pred_fallthru
      _
    %s34 = scalar_lea.vmem [#allocation2], 400
    %v35 = vld [vmem:[%s34] sm:$0xf]
    %v36 = vld [vmem:[%s34 + $0x4] sm:$0xf]
    %v37 = vunpack.c.l.bf16 %v35
    %v38 = vunpack.c.l.bf16 %v36
    %s39 = scalar_lea.vmem [#allocation2], 408
    %v40 = vld [vmem:[%s39] sm:$0xf]
    %v41 = vld [vmem:[%s39 + $0x4] sm:$0xf]
    %v42 = vunpack.c.l.bf16 %v40
    %v43 = vunpack.c.l.bf16 %v41
    %s44 = scalar_lea.vmem [#allocation2], 416
    %v45 = vld [vmem:[%s44] sm:$0xf]
    %v46 = vld [vmem:[%s44 + $0x4] sm:$0xf]
    %v47 = vunpack.c.l.bf16 %v45
    %v48 = vunpack.c.l.bf16 %v46
    %s49 = scalar_lea.vmem [#allocation2], 424
    %v50 = vld [vmem:[%s49] sm:$0xf]
    %v51 = vld [vmem:[%s49 + $0x4] sm:$0xf]
    %v52 = vunpack.c.l.bf16 %v50
    %v53 = vunpack.c.l.bf16 %v51
    %s54 = scalar_lea.vmem [#allocation2], 432
    %v55 = vld [vmem:[%s54] sm:$0xf]
    %v56 = vld [vmem:[%s54 + $0x4] sm:$0xf]
    %v57 = vunpack.c.l.bf16 %v55
    %v58 = vunpack.c.l.bf16 %v56
    %v59 = vmul.f32 %v52, 0.5
    %v60 = vmul.f32 %v53, 0.5
    %v61 = vsub.f32 %v42, %v59
    %v62 = vsub.f32 %v43, %v60
    %v63 = vadd.f32 %v42, %v59
    %v64 = vadd.f32 %v43, %v60
    %v65 = vmul.f32 %v57, 0.5
    %v66 = vmul.f32 %v58, 0.5
    %v67 = vsub.f32 %v47, %v65
    %v68 = vsub.f32 %v48, %v66
    %v69 = vadd.f32 %v47, %v65
    %v70 = vadd.f32 %v48, %v66
    %v71 = vsub.f32 %v63, %v61
    %v72 = vsub.f32 %v64, %v62
    %v73 = vsub.f32 %v69, %v67
    %v74 = vsub.f32 %v70, %v68
    %v75 = vmul.f32 %v71, %v73
    %v76 = vmul.f32 %v72, %v74
    %v77 = vand.u32 2147483647, %v75
    %v78 = vand.u32 2147483647, %v76
    %s79 = scalar_lea.vmem [#allocation2], 168
    %v80 = vld [vmem:[%s79] sm:$0xf]
    %v81 = vld [vmem:[%s79 + $0x4] sm:$0xf]
    %v82 = vunpack.c.l.bf16 %v80
    %v83 = vunpack.c.l.bf16 %v81
    %s84 = scalar_lea.vmem [#allocation2], 176
    %v85 = vld [vmem:[%s84] sm:$0xf]
    %v86 = vld [vmem:[%s84 + $0x4] sm:$0xf]
    %v87 = vunpack.c.l.bf16 %v85
    %v88 = vunpack.c.l.bf16 %v86
    %s89 = scalar_lea.vmem [#allocation2], 184
    %v90 = vld [vmem:[%s89] sm:$0xf]
    %v91 = vld [vmem:[%s89 + $0x4] sm:$0xf]
    %v92 = vunpack.c.l.bf16 %v90
    %v93 = vunpack.c.l.bf16 %v91
    %s94 = scalar_lea.vmem [#allocation2], 192
    %v95 = vld [vmem:[%s94] sm:$0xf]
    %v96 = vld [vmem:[%s94 + $0x4] sm:$0xf]
    %v97 = vunpack.c.l.bf16 %v95
    %v98 = vunpack.c.l.bf16 %v96
    %s99 = scalar_lea.vmem [#allocation2], 208
    %v100 = vld [vmem:[%s99] sm:$0xf]
    %v101 = vld [vmem:[%s99 + $0x4] sm:$0xf]
    %v102 = vunpack.c.l.bf16 %v100
    %v103 = vunpack.c.l.bf16 %v101
    %s104 = scalar_lea.vmem [#allocation2], 216
    %v105 = vld [vmem:[%s104] sm:$0xf]
    %v106 = vld [vmem:[%s104 + $0x4] sm:$0xf]
    %v107 = vunpack.c.l.bf16 %v105
    %v108 = vunpack.c.l.bf16 %v106
    %s109 = scalar_lea.vmem [#allocation2], 224
    %v110 = vld [vmem:[%s109] sm:$0xf]
    %v111 = vld [vmem:[%s109 + $0x4] sm:$0xf]
    %v112 = vunpack.c.l.bf16 %v110
    %v113 = vunpack.c.l.bf16 %v111
    %s114 = scalar_lea.vmem [#allocation2], 232
    %v115 = vld [vmem:[%s114] sm:$0xf]
    %v116 = vld [vmem:[%s114 + $0x4] sm:$0xf]
    %v117 = vunpack.c.l.bf16 %v115
    %v118 = vunpack.c.l.bf16 %v116
    %v119 = vmul.f32 %v92, 0.5
    %v120 = vmul.f32 %v93, 0.5
    %v121 = vsub.f32 %v82, %v119
    %v122 = vsub.f32 %v83, %v120
    %v123 = vadd.f32 %v82, %v119
    %v124 = vadd.f32 %v83, %v120
    %v125 = vmul.f32 %v97, 0.5
    %v126 = vmul.f32 %v98, 0.5
    %v127 = vsub.f32 %v87, %v125
    %v128 = vsub.f32 %v88, %v126
    %v129 = vadd.f32 %v87, %v125
    %v130 = vadd.f32 %v88, %v126
    %v131 = vmin.f32 %v123, %v63
    %v132 = vmin.f32 %v124, %v64
    %v133 = vmax.f32 %v121, %v61
    %v134 = vmax.f32 %v122, %v62
    %v135 = vsub.f32 %v131, %v133
    %v136 = vsub.f32 %v132, %v134
    %v137 = vmax.f32 %v135, 0.0
    %v138 = vmax.f32 %v136, 0.0
    %v139 = vmin.f32 %v129, %v69
    %v140 = vmin.f32 %v130, %v70
    %v141 = vmax.f32 %v127, %v67
    %v142 = vmax.f32 %v128, %v68
    %v143 = vsub.f32 %v139, %v141
    %v144 = vsub.f32 %v140, %v142
    %v145 = vmax.f32 %v143, 0.0
    %v146 = vmax.f32 %v144, 0.0
    %v147 = vmul.f32 %v137, %v145
    %v148 = vmul.f32 %v138, %v146
    %v149 = vsub.f32 %v123, %v121
    %v150 = vsub.f32 %v124, %v122
    %v151 = vsub.f32 %v129, %v127
    %v152 = vsub.f32 %v130, %v128
    %v153 = vmul.f32 %v149, %v151
    %v154 = vmul.f32 %v150, %v152
    %v155 = vand.u32 2147483647, %v153
    %v156 = vand.u32 2147483647, %v154
    %v157 = vadd.f32 %v155, %v77
    %v158 = vadd.f32 %v156, %v78
    %v159 = vsub.f32 %v157, %v147
    %v160 = vsub.f32 %v158, %v148
    %v161 = vadd.f32 %v159, 1e-06
    %v162 = vadd.f32 %v160, 1e-06
    %v163 = vmul.f32 %v112, 0.5
    %v164 = vmul.f32 %v113, 0.5
    %v165 = vsub.f32 %v102, %v163
    %v166 = vsub.f32 %v103, %v164
    %v167 = vadd.f32 %v102, %v163
    %v168 = vadd.f32 %v103, %v164
    %v169 = vmul.f32 %v117, 0.5
    %v170 = vmul.f32 %v118, 0.5
    %v171 = vsub.f32 %v107, %v169
    %v172 = vsub.f32 %v108, %v170
    %v173 = vadd.f32 %v107, %v169
    %v174 = vadd.f32 %v108, %v170
    %v175 = vmin.f32 %v167, %v63
    %v176 = vmin.f32 %v168, %v64
    %v177 = vmax.f32 %v165, %v61
    %v178 = vmax.f32 %v166, %v62
    %v179 = vsub.f32 %v175, %v177
    %v180 = vsub.f32 %v176, %v178
    %v181 = vmax.f32 %v179, 0.0
    %v182 = vmax.f32 %v180, 0.0
    %v183 = vmin.f32 %v173, %v69
    %v184 = vmin.f32 %v174, %v70
    %v185 = vmax.f32 %v171, %v67
    %v186 = vmax.f32 %v172, %v68
    %v187 = vsub.f32 %v183, %v185
    %v188 = vsub.f32 %v184, %v186
    %v189 = vmax.f32 %v187, 0.0
    %v190 = vmax.f32 %v188, 0.0
    %v191 = vmul.f32 %v181, %v189
    %v192 = vmul.f32 %v182, %v190
    %v193 = vsub.f32 %v167, %v165
    %v194 = vsub.f32 %v168, %v166
    %v195 = vsub.f32 %v173, %v171
    %v196 = vsub.f32 %v174, %v172
    %v197 = vmul.f32 %v193, %v195
    %v198 = vmul.f32 %v194, %v196
    %v199 = vand.u32 2147483647, %v197
    %v200 = vand.u32 2147483647, %v198
    %v201 = vadd.f32 %v199, %v77
    %v202 = vadd.f32 %v200, %v78
    %v203 = vsub.f32 %v201, %v191
    %v204 = vsub.f32 %v202, %v192
    %v205 = vadd.f32 %v203, 1e-06
    %v206 = vadd.f32 %v204, 1e-06
    %v207 = vmul.f32 %v191, %v161
    %v208 = vmul.f32 %v192, %v162
    %v209 = vmul.f32 %v147, %v205
    %v210 = vmul.f32 %v148, %v206
    %vm211 = vcmp.gt.f32.partialorder %v207, %v209
    %vm212 = vcmp.gt.f32.partialorder %v208, %v210
    %v213 = vsel %vm211, %v102, %v82
    %v214 = vsel %vm212, %v103, %v83
    %v215 = vmul.f32 %v37, %v213
    %v216 = vmul.f32 %v38, %v214
    %v217 = vsel %vm211, %v107, %v87
    %v218 = vsel %vm212, %v108, %v88
    %v219 = vmul.f32 %v37, %v217
    %v220 = vmul.f32 %v38, %v218
    %v221 = vsel %vm211, %v112, %v92
    %v222 = vsel %vm212, %v113, %v93
    %v223 = vmul.f32 %v37, %v221
    %v224 = vmul.f32 %v38, %v222
    %v225 = vsel %vm211, %v117, %v97
    %v226 = vsel %vm212, %v118, %v98
    %v227 = vmul.f32 %v37, %v225
    %v228 = vmul.f32 %v38, %v226
    %v229 = vmul.f32 %v37, %v42
    %v230 = vmul.f32 %v38, %v43
    %v231 = vsub.f32 %v215, %v229
    %v232 = vsub.f32 %v216, %v230
    %v233 = vmul.f32 %v231, %v231
    %v234 = vmul.f32 %v232, %v232
    %v235 = vmul.f32 %v37, %v47
    %v236 = vmul.f32 %v38, %v48
    %v237 = vsub.f32 %v219, %v235
    %v238 = vsub.f32 %v220, %v236
    %v239 = vmul.f32 %v237, %v237
    %v240 = vmul.f32 %v238, %v238
    %v241 = vadd.f32 %v233, %v239
    %v242 = vadd.f32 %v234, %v240
    %vm243 = vcmp.gt.f32.partialorder %v223, 0.0
    %vm244 = vcmp.gt.f32.partialorder %v224, 0.0
    %vm245 = vcmp.lt.f32.partialorder %v223, 0.0
    %vm246 = vcmp.lt.f32.partialorder %v224, 0.0
    %v247 = vsel %vm245, -1.0, 0.0
    %v248 = vsel %vm246, -1.0, 0.0
    %v249 = vsel %vm243, 1.0, %v247
    %v250 = vsel %vm244, 1.0, %v248
    %v251 = vadd.f32 %v223, 1e-06
    %v252 = vadd.f32 %v224, 1e-06
    %v253 = vand.u32 2147483647, %v251
    %v254 = vand.u32 2147483647, %v252
    %v255 = vrsqrt.pop %v253
    %v256 = vmul.f32 %v253, %v255
    %vm257 = vcmp.eq.f32.partialorder %v253, inf
    %v258 = vsel %vm257, %v253, %v256
    %vm259 = vcmp.eq.f32.partialorder %v253, 0.0
    %v260 = vand.u32 %v253, 2147483648
    %v261 = vsel %vm259, %v260, %v258
    %v262 = vrsqrt.pop %v254
    %v263 = vmul.f32 %v254, %v262
    %vm264 = vcmp.eq.f32.partialorder %v254, inf
    %v265 = vsel %vm264, %v254, %v263
    %vm266 = vcmp.eq.f32.partialorder %v254, 0.0
    %v267 = vand.u32 %v254, 2147483648
    %v268 = vsel %vm266, %v267, %v265
    %v269 = vmul.f32 %v249, %v261
    %v270 = vmul.f32 %v250, %v268
    %v271 = vmul.f32 %v37, %v52
    %v272 = vmul.f32 %v38, %v53
    %v273 = vrsqrt.pop %v271
    %v274 = vmul.f32 %v271, %v273
    %vm275 = vcmp.eq.f32.partialorder %v271, inf
    %v276 = vsel %vm275, %v271, %v274
    %vm277 = vcmp.eq.f32.partialorder %v271, 0.0
    %v278 = vand.u32 %v271, 2147483648
    %v279 = vsel %vm277, %v278, %v276
    %v280 = vrsqrt.pop %v272
    %v281 = vmul.f32 %v272, %v280
    %vm282 = vcmp.eq.f32.partialorder %v272, inf
    %v283 = vsel %vm282, %v272, %v281
    %vm284 = vcmp.eq.f32.partialorder %v272, 0.0
    %v285 = vand.u32 %v272, 2147483648
    %v286 = vsel %vm284, %v285, %v283
    %v287 = vsub.f32 %v269, %v279
    %v288 = vsub.f32 %v270, %v286
    %v289 = vmul.f32 %v287, %v287
    %v290 = vmul.f32 %v288, %v288
    %v291 = vadd.f32 %v241, %v289
    %v292 = vadd.f32 %v242, %v290
    %vm293 = vcmp.gt.f32.partialorder %v227, 0.0
    %vm294 = vcmp.gt.f32.partialorder %v228, 0.0
    %vm295 = vcmp.lt.f32.partialorder %v227, 0.0
    %vm296 = vcmp.lt.f32.partialorder %v228, 0.0
    %v297 = vsel %vm295, -1.0, 0.0
    %v298 = vsel %vm296, -1.0, 0.0
    %v299 = vsel %vm293, 1.0, %v297
    %v300 = vsel %vm294, 1.0, %v298
    %v301 = vadd.f32 %v227, 1e-06
    %v302 = vadd.f32 %v228, 1e-06
    %v303 = vand.u32 2147483647, %v301
    %v304 = vand.u32 2147483647, %v302
    %v305 = vrsqrt.pop %v303
    %v306 = vmul.f32 %v303, %v305
    %vm307 = vcmp.eq.f32.partialorder %v303, inf
    %v308 = vsel %vm307, %v303, %v306
    %vm309 = vcmp.eq.f32.partialorder %v303, 0.0
    %v310 = vand.u32 %v303, 2147483648
    %v311 = vsel %vm309, %v310, %v308
    %v312 = vrsqrt.pop %v304
    %v313 = vmul.f32 %v304, %v312
    %vm314 = vcmp.eq.f32.partialorder %v304, inf
    %v315 = vsel %vm314, %v304, %v313
    %vm316 = vcmp.eq.f32.partialorder %v304, 0.0
    %v317 = vand.u32 %v304, 2147483648
    %v318 = vsel %vm316, %v317, %v315
    %v319 = vmul.f32 %v299, %v311
    %v320 = vmul.f32 %v300, %v318
    %v321 = vmul.f32 %v37, %v57
    %v322 = vmul.f32 %v38, %v58
    %v323 = vrsqrt.pop %v321
    %v324 = vmul.f32 %v321, %v323
    %vm325 = vcmp.eq.f32.partialorder %v321, inf
    %v326 = vsel %vm325, %v321, %v324
    %vm327 = vcmp.eq.f32.partialorder %v321, 0.0
    %v328 = vand.u32 %v321, 2147483648
    %v329 = vsel %vm327, %v328, %v326
    %v330 = vrsqrt.pop %v322
    %v331 = vmul.f32 %v322, %v330
    %vm332 = vcmp.eq.f32.partialorder %v322, inf
    %v333 = vsel %vm332, %v322, %v331
    %vm334 = vcmp.eq.f32.partialorder %v322, 0.0
    %v335 = vand.u32 %v322, 2147483648
    %v336 = vsel %vm334, %v335, %v333
    %v337 = vsub.f32 %v319, %v329
    %v338 = vsub.f32 %v320, %v336
    %v339 = vmul.f32 %v337, %v337
    %v340 = vmul.f32 %v338, %v338
    %v341 = vadd.f32 %v291, %v339
    %v342 = vadd.f32 %v292, %v340
    %v343 = vmul.f32 %v37, %v37
    %v344 = vmul.f32 %v38, %v38
    %v345 = vsub.f32 1.0, %v37
    %v346 = vsub.f32 1.0, %v38
    %v347 = vmul.f32 %v345, %v345
    %v348 = vmul.f32 %v346, %v346
    %s349 = scalar_lea.vmem [#allocation2], 200
    %v350 = vld [vmem:[%s349] sm:$0xf]
    %v351 = vld [vmem:[%s349 + $0x4] sm:$0xf]
    %v352 = vunpack.c.l.bf16 %v350
    %v353 = vunpack.c.l.bf16 %v351
    %s354 = scalar_lea.vmem [#allocation2], 160
    %v355 = vld [vmem:[%s354] sm:$0xf]
    %v356 = vld [vmem:[%s354 + $0x4] sm:$0xf]
    %v357 = vunpack.c.l.bf16 %v355
    %v358 = vunpack.c.l.bf16 %v356
    %v359 = vsel %vm211, %v352, %v357
    %v360 = vsel %vm212, %v353, %v358
    %v361 = vsub.f32 %v359, %v37
    %v362 = vsub.f32 %v360, %v38
    %v363 = vmul.f32 %v361, %v361
    %v364 = vmul.f32 %v362, %v362
    %v365 = vmul.f32 %v343, %v363
    %v366 = vmul.f32 %v344, %v364
    %v367 = vsub.f32 %v357, %v37
    %v368 = vsub.f32 %v358, %v38
    %v369 = vmul.f32 %v367, %v367
    %v370 = vmul.f32 %v368, %v368
    %v371 = vsub.f32 %v352, %v37
    %v372 = vsub.f32 %v353, %v38
    %v373 = vmul.f32 %v371, %v371
    %v374 = vmul.f32 %v372, %v372
    %v375 = vadd.f32 %v369, %v373
    %v376 = vadd.f32 %v370, %v374
    %v377 = vmul.f32 %v347, %v375
    %v378 = vmul.f32 %v348, %v376
    %v379 = vld [vmem:[#allocation2] sm:$0xf]
    %v380 = vld [vmem:[#allocation2 + $0x4] sm:$0xf]
    %v381 = vunpack.c.l.bf16 %v379
    %v382 = vunpack.c.l.bf16 %v380
    %s383 = scalar_lea.vmem [#allocation2], 240
    %v384 = vld [vmem:[%s383] sm:$0xf]
    %v385 = vld [vmem:[%s383 + $0x4] sm:$0xf]
    %v386 = vunpack.c.l.bf16 %v384
    %v387 = vunpack.c.l.bf16 %v385
    %v388 = vsub.f32 %v381, %v386
    %v389 = vsub.f32 %v382, %v387
    %v390 = vmul.f32 %v388, %v388
    %v391 = vmul.f32 %v389, %v389
    %s392 = scalar_lea.vmem [#allocation2], 8
    %v393 = vld [vmem:[%s392] sm:$0xf]
    %v394 = vld [vmem:[%s392 + $0x4] sm:$0xf]
    %v395 = vunpack.c.l.bf16 %v393
    %v396 = vunpack.c.l.bf16 %v394
    %s397 = scalar_lea.vmem [#allocation2], 248
    %v398 = vld [vmem:[%s397] sm:$0xf]
    %v399 = vld [vmem:[%s397 + $0x4] sm:$0xf]
    %v400 = vunpack.c.l.bf16 %v398
    %v401 = vunpack.c.l.bf16 %v399
    %v402 = vsub.f32 %v395, %v400
    %v403 = vsub.f32 %v396, %v401
    %v404 = vmul.f32 %v402, %v402
    %v405 = vmul.f32 %v403, %v403
    %v406 = vadd.f32 %v390, %v404
    %v407 = vadd.f32 %v391, %v405
    %s408 = scalar_lea.vmem [#allocation2], 16
    %v409 = vld [vmem:[%s408] sm:$0xf]
    %v410 = vld [vmem:[%s408 + $0x4] sm:$0xf]
    %v411 = vunpack.c.l.bf16 %v409
    %v412 = vunpack.c.l.bf16 %v410
    %s413 = scalar_lea.vmem [#allocation2], 256
    %v414 = vld [vmem:[%s413] sm:$0xf]
    %v415 = vld [vmem:[%s413 + $0x4] sm:$0xf]
    %v416 = vunpack.c.l.bf16 %v414
    %v417 = vunpack.c.l.bf16 %v415
    %v418 = vsub.f32 %v411, %v416
    %v419 = vsub.f32 %v412, %v417
    %v420 = vmul.f32 %v418, %v418
    %v421 = vmul.f32 %v419, %v419
    %v422 = vadd.f32 %v406, %v420
    %v423 = vadd.f32 %v407, %v421
    %s424 = scalar_lea.vmem [#allocation2], 24
    %v425 = vld [vmem:[%s424] sm:$0xf]
    %v426 = vld [vmem:[%s424 + $0x4] sm:$0xf]
    %v427 = vunpack.c.l.bf16 %v425
    %v428 = vunpack.c.l.bf16 %v426
    %s429 = scalar_lea.vmem [#allocation2], 264
    %v430 = vld [vmem:[%s429] sm:$0xf]
    %v431 = vld [vmem:[%s429 + $0x4] sm:$0xf]
    %v432 = vunpack.c.l.bf16 %v430
    %v433 = vunpack.c.l.bf16 %v431
    %v434 = vsub.f32 %v427, %v432
    %v435 = vsub.f32 %v428, %v433
    %v436 = vmul.f32 %v434, %v434
    %v437 = vmul.f32 %v435, %v435
    %v438 = vadd.f32 %v422, %v436
    %v439 = vadd.f32 %v423, %v437
    %s440 = scalar_lea.vmem [#allocation2], 32
    %v441 = vld [vmem:[%s440] sm:$0xf]
    %v442 = vld [vmem:[%s440 + $0x4] sm:$0xf]
    %v443 = vunpack.c.l.bf16 %v441
    %v444 = vunpack.c.l.bf16 %v442
    %s445 = scalar_lea.vmem [#allocation2], 272
    %v446 = vld [vmem:[%s445] sm:$0xf]
    %v447 = vld [vmem:[%s445 + $0x4] sm:$0xf]
    %v448 = vunpack.c.l.bf16 %v446
    %v449 = vunpack.c.l.bf16 %v447
    %v450 = vsub.f32 %v443, %v448
    %v451 = vsub.f32 %v444, %v449
    %v452 = vmul.f32 %v450, %v450
    %v453 = vmul.f32 %v451, %v451
    %v454 = vadd.f32 %v438, %v452
    %v455 = vadd.f32 %v439, %v453
    %s456 = scalar_lea.vmem [#allocation2], 40
    %v457 = vld [vmem:[%s456] sm:$0xf]
    %v458 = vld [vmem:[%s456 + $0x4] sm:$0xf]
    %v459 = vunpack.c.l.bf16 %v457
    %v460 = vunpack.c.l.bf16 %v458
    %s461 = scalar_lea.vmem [#allocation2], 280
    %v462 = vld [vmem:[%s461] sm:$0xf]
    %v463 = vld [vmem:[%s461 + $0x4] sm:$0xf]
    %v464 = vunpack.c.l.bf16 %v462
    %v465 = vunpack.c.l.bf16 %v463
    %v466 = vsub.f32 %v459, %v464
    %v467 = vsub.f32 %v460, %v465
    %v468 = vmul.f32 %v466, %v466
    %v469 = vmul.f32 %v467, %v467
    %v470 = vadd.f32 %v454, %v468
    %v471 = vadd.f32 %v455, %v469
    %s472 = scalar_lea.vmem [#allocation2], 48
    %v473 = vld [vmem:[%s472] sm:$0xf]
    %v474 = vld [vmem:[%s472 + $0x4] sm:$0xf]
    %v475 = vunpack.c.l.bf16 %v473
    %v476 = vunpack.c.l.bf16 %v474
    %s477 = scalar_lea.vmem [#allocation2], 288
    %v478 = vld [vmem:[%s477] sm:$0xf]
    %v479 = vld [vmem:[%s477 + $0x4] sm:$0xf]
    %v480 = vunpack.c.l.bf16 %v478
    %v481 = vunpack.c.l.bf16 %v479
    %v482 = vsub.f32 %v475, %v480
    %v483 = vsub.f32 %v476, %v481
    %v484 = vmul.f32 %v482, %v482
    %v485 = vmul.f32 %v483, %v483
    %v486 = vadd.f32 %v470, %v484
    %v487 = vadd.f32 %v471, %v485
    %s488 = scalar_lea.vmem [#allocation2], 56
    %v489 = vld [vmem:[%s488] sm:$0xf]
    %v490 = vld [vmem:[%s488 + $0x4] sm:$0xf]
    %v491 = vunpack.c.l.bf16 %v489
    %v492 = vunpack.c.l.bf16 %v490
    %s493 = scalar_lea.vmem [#allocation2], 296
    %v494 = vld [vmem:[%s493] sm:$0xf]
    %v495 = vld [vmem:[%s493 + $0x4] sm:$0xf]
    %v496 = vunpack.c.l.bf16 %v494
    %v497 = vunpack.c.l.bf16 %v495
    %v498 = vsub.f32 %v491, %v496
    %v499 = vsub.f32 %v492, %v497
    %v500 = vmul.f32 %v498, %v498
    %v501 = vmul.f32 %v499, %v499
    %v502 = vadd.f32 %v486, %v500
    %v503 = vadd.f32 %v487, %v501
    %s504 = scalar_lea.vmem [#allocation2], 64
    %v505 = vld [vmem:[%s504] sm:$0xf]
    %v506 = vld [vmem:[%s504 + $0x4] sm:$0xf]
    %v507 = vunpack.c.l.bf16 %v505
    %v508 = vunpack.c.l.bf16 %v506
    %s509 = scalar_lea.vmem [#allocation2], 304
    %v510 = vld [vmem:[%s509] sm:$0xf]
    %v511 = vld [vmem:[%s509 + $0x4] sm:$0xf]
    %v512 = vunpack.c.l.bf16 %v510
    %v513 = vunpack.c.l.bf16 %v511
    %v514 = vsub.f32 %v507, %v512
    %v515 = vsub.f32 %v508, %v513
    %v516 = vmul.f32 %v514, %v514
    %v517 = vmul.f32 %v515, %v515
    %v518 = vadd.f32 %v502, %v516
    %v519 = vadd.f32 %v503, %v517
    %s520 = scalar_lea.vmem [#allocation2], 72
    %v521 = vld [vmem:[%s520] sm:$0xf]
    %v522 = vld [vmem:[%s520 + $0x4] sm:$0xf]
    %v523 = vunpack.c.l.bf16 %v521
    %v524 = vunpack.c.l.bf16 %v522
    %s525 = scalar_lea.vmem [#allocation2], 312
    %v526 = vld [vmem:[%s525] sm:$0xf]
    %v527 = vld [vmem:[%s525 + $0x4] sm:$0xf]
    %v528 = vunpack.c.l.bf16 %v526
    %v529 = vunpack.c.l.bf16 %v527
    %v530 = vsub.f32 %v523, %v528
    %v531 = vsub.f32 %v524, %v529
    %v532 = vmul.f32 %v530, %v530
    %v533 = vmul.f32 %v531, %v531
    %v534 = vadd.f32 %v518, %v532
    %v535 = vadd.f32 %v519, %v533
    %s536 = scalar_lea.vmem [#allocation2], 80
    %v537 = vld [vmem:[%s536] sm:$0xf]
    %v538 = vld [vmem:[%s536 + $0x4] sm:$0xf]
    %v539 = vunpack.c.l.bf16 %v537
    %v540 = vunpack.c.l.bf16 %v538
    %s541 = scalar_lea.vmem [#allocation2], 320
    %v542 = vld [vmem:[%s541] sm:$0xf]
    %v543 = vld [vmem:[%s541 + $0x4] sm:$0xf]
    %v544 = vunpack.c.l.bf16 %v542
    %v545 = vunpack.c.l.bf16 %v543
    %v546 = vsub.f32 %v539, %v544
    %v547 = vsub.f32 %v540, %v545
    %v548 = vmul.f32 %v546, %v546
    %v549 = vmul.f32 %v547, %v547
    %v550 = vadd.f32 %v534, %v548
    %v551 = vadd.f32 %v535, %v549
    %s552 = scalar_lea.vmem [#allocation2], 88
    %v553 = vld [vmem:[%s552] sm:$0xf]
    %v554 = vld [vmem:[%s552 + $0x4] sm:$0xf]
    %v555 = vunpack.c.l.bf16 %v553
    %v556 = vunpack.c.l.bf16 %v554
    %s557 = scalar_lea.vmem [#allocation2], 328
    %v558 = vld [vmem:[%s557] sm:$0xf]
    %v559 = vld [vmem:[%s557 + $0x4] sm:$0xf]
    %v560 = vunpack.c.l.bf16 %v558
    %v561 = vunpack.c.l.bf16 %v559
    %v562 = vsub.f32 %v555, %v560
    %v563 = vsub.f32 %v556, %v561
    %v564 = vmul.f32 %v562, %v562
    %v565 = vmul.f32 %v563, %v563
    %v566 = vadd.f32 %v550, %v564
    %v567 = vadd.f32 %v551, %v565
    %s568 = scalar_lea.vmem [#allocation2], 96
    %v569 = vld [vmem:[%s568] sm:$0xf]
    %v570 = vld [vmem:[%s568 + $0x4] sm:$0xf]
    %v571 = vunpack.c.l.bf16 %v569
    %v572 = vunpack.c.l.bf16 %v570
    %s573 = scalar_lea.vmem [#allocation2], 336
    %v574 = vld [vmem:[%s573] sm:$0xf]
    %v575 = vld [vmem:[%s573 + $0x4] sm:$0xf]
    %v576 = vunpack.c.l.bf16 %v574
    %v577 = vunpack.c.l.bf16 %v575
    %v578 = vsub.f32 %v571, %v576
    %v579 = vsub.f32 %v572, %v577
    %v580 = vmul.f32 %v578, %v578
    %v581 = vmul.f32 %v579, %v579
    %v582 = vadd.f32 %v566, %v580
    %v583 = vadd.f32 %v567, %v581
    %s584 = scalar_lea.vmem [#allocation2], 104
    %v585 = vld [vmem:[%s584] sm:$0xf]
    %v586 = vld [vmem:[%s584 + $0x4] sm:$0xf]
    %v587 = vunpack.c.l.bf16 %v585
    %v588 = vunpack.c.l.bf16 %v586
    %s589 = scalar_lea.vmem [#allocation2], 344
    %v590 = vld [vmem:[%s589] sm:$0xf]
    %v591 = vld [vmem:[%s589 + $0x4] sm:$0xf]
    %v592 = vunpack.c.l.bf16 %v590
    %v593 = vunpack.c.l.bf16 %v591
    %v594 = vsub.f32 %v587, %v592
    %v595 = vsub.f32 %v588, %v593
    %v596 = vmul.f32 %v594, %v594
    %v597 = vmul.f32 %v595, %v595
    %v598 = vadd.f32 %v582, %v596
    %v599 = vadd.f32 %v583, %v597
    %s600 = scalar_lea.vmem [#allocation2], 112
    %v601 = vld [vmem:[%s600] sm:$0xf]
    %v602 = vld [vmem:[%s600 + $0x4] sm:$0xf]
    %v603 = vunpack.c.l.bf16 %v601
    %v604 = vunpack.c.l.bf16 %v602
    %s605 = scalar_lea.vmem [#allocation2], 352
    %v606 = vld [vmem:[%s605] sm:$0xf]
    %v607 = vld [vmem:[%s605 + $0x4] sm:$0xf]
    %v608 = vunpack.c.l.bf16 %v606
    %v609 = vunpack.c.l.bf16 %v607
    %v610 = vsub.f32 %v603, %v608
    %v611 = vsub.f32 %v604, %v609
    %v612 = vmul.f32 %v610, %v610
    %v613 = vmul.f32 %v611, %v611
    %v614 = vadd.f32 %v598, %v612
    %v615 = vadd.f32 %v599, %v613
    %s616 = scalar_lea.vmem [#allocation2], 120
    %v617 = vld [vmem:[%s616] sm:$0xf]
    %v618 = vld [vmem:[%s616 + $0x4] sm:$0xf]
    %v619 = vunpack.c.l.bf16 %v617
    %v620 = vunpack.c.l.bf16 %v618
    %s621 = scalar_lea.vmem [#allocation2], 360
    %v622 = vld [vmem:[%s621] sm:$0xf]
    %v623 = vld [vmem:[%s621 + $0x4] sm:$0xf]
    %v624 = vunpack.c.l.bf16 %v622
    %v625 = vunpack.c.l.bf16 %v623
    %v626 = vsub.f32 %v619, %v624
    %v627 = vsub.f32 %v620, %v625
    %v628 = vmul.f32 %v626, %v626
    %v629 = vmul.f32 %v627, %v627
    %v630 = vadd.f32 %v614, %v628
    %v631 = vadd.f32 %v615, %v629
    %s632 = scalar_lea.vmem [#allocation2], 128
    %v633 = vld [vmem:[%s632] sm:$0xf]
    %v634 = vld [vmem:[%s632 + $0x4] sm:$0xf]
    %v635 = vunpack.c.l.bf16 %v633
    %v636 = vunpack.c.l.bf16 %v634
    %s637 = scalar_lea.vmem [#allocation2], 368
    %v638 = vld [vmem:[%s637] sm:$0xf]
    %v639 = vld [vmem:[%s637 + $0x4] sm:$0xf]
    %v640 = vunpack.c.l.bf16 %v638
    %v641 = vunpack.c.l.bf16 %v639
    %v642 = vsub.f32 %v635, %v640
    %v643 = vsub.f32 %v636, %v641
    %v644 = vmul.f32 %v642, %v642
    %v645 = vmul.f32 %v643, %v643
    %v646 = vadd.f32 %v630, %v644
    %v647 = vadd.f32 %v631, %v645
    %s648 = scalar_lea.vmem [#allocation2], 136
    %v649 = vld [vmem:[%s648] sm:$0xf]
    %v650 = vld [vmem:[%s648 + $0x4] sm:$0xf]
    %v651 = vunpack.c.l.bf16 %v649
    %v652 = vunpack.c.l.bf16 %v650
    %s653 = scalar_lea.vmem [#allocation2], 376
    %v654 = vld [vmem:[%s653] sm:$0xf]
    %v655 = vld [vmem:[%s653 + $0x4] sm:$0xf]
    %v656 = vunpack.c.l.bf16 %v654
    %v657 = vunpack.c.l.bf16 %v655
    %v658 = vsub.f32 %v651, %v656
    %v659 = vsub.f32 %v652, %v657
    %v660 = vmul.f32 %v658, %v658
    %v661 = vmul.f32 %v659, %v659
    %v662 = vadd.f32 %v646, %v660
    %v663 = vadd.f32 %v647, %v661
    %s664 = scalar_lea.vmem [#allocation2], 144
    %v665 = vld [vmem:[%s664] sm:$0xf]
    %v666 = vld [vmem:[%s664 + $0x4] sm:$0xf]
    %v667 = vunpack.c.l.bf16 %v665
    %v668 = vunpack.c.l.bf16 %v666
    %s669 = scalar_lea.vmem [#allocation2], 384
    %v670 = vld [vmem:[%s669] sm:$0xf]
    %v671 = vld [vmem:[%s669 + $0x4] sm:$0xf]
    %v672 = vunpack.c.l.bf16 %v670
    %v673 = vunpack.c.l.bf16 %v671
    %v674 = vsub.f32 %v667, %v672
    %v675 = vsub.f32 %v668, %v673
    %v676 = vmul.f32 %v674, %v674
    %v677 = vmul.f32 %v675, %v675
    %v678 = vadd.f32 %v662, %v676
    %v679 = vadd.f32 %v663, %v677
    %s680 = scalar_lea.vmem [#allocation2], 152
    %v681 = vld [vmem:[%s680] sm:$0xf]
    %v682 = vld [vmem:[%s680 + $0x4] sm:$0xf]
    %v683 = vunpack.c.l.bf16 %v681
    %v684 = vunpack.c.l.bf16 %v682
    %s685 = scalar_lea.vmem [#allocation2], 392
    %v686 = vld [vmem:[%s685] sm:$0xf]
    %v687 = vld [vmem:[%s685 + $0x4] sm:$0xf]
    %v688 = vunpack.c.l.bf16 %v686
    %v689 = vunpack.c.l.bf16 %v687
    %v690 = vsub.f32 %v683, %v688
    %v691 = vsub.f32 %v684, %v689
    %v692 = vmul.f32 %v690, %v690
    %v693 = vmul.f32 %v691, %v691
    %v694 = vadd.f32 %v678, %v692
    %v695 = vadd.f32 %v679, %v693
    %v696 = vmul.f32 %v343, %v694
    %v697 = vmul.f32 %v344, %v695
    %v698 = vmul.f32 %v341, 5.0
    %v699 = vmul.f32 %v342, 5.0
    %v700 = vadd.f32 %v698, %v365
    %v701 = vadd.f32 %v699, %v366
    %v702 = vmul.f32 %v377, 0.5
    %v703 = vmul.f32 %v378, 0.5
    %v704 = vadd.f32 %v700, %v702
    %v705 = vadd.f32 %v701, %v703
    %v706 = vadd.f32 %v704, %v696
    %v707 = vadd.f32 %v705, %v697
    %s708 = sadd.s32 0, 0
    %s709 = smul.u32 %s708, 2048
    %v710 = vlaneseq
    %v711 = vshrl.u32 %v710, 7
    %v712 = vadd.s32 %v711, 8
    %v713 = vlaneseq
    %v714 = vand.u32 %v713, 127
    %v715 = vmul.u32 %v711, 128
    %v716 = vmul.u32 %v712, 128
    %v717 = vstv %s709
    %v718 = vadd.s32 %v717, %v715
    %v719 = vadd.s32 %v717, %v716
    %v720 = vadd.s32 %v718, %v714
    %v721 = vadd.s32 %v719, %v714
    %vm722 = vcmp.lt.s32.totalorder %v720, 98
    %vm723 = vcmp.lt.s32.totalorder %v721, 98
    %v724 = vsel %vm722, %v706, 0.0
    %v725 = vsel %vm723, %v707, 0.0
    %v726 = vadd.f32 %v724, %v725
    %v727 = vld [vmem:[#allocation5] sm:$0xff]
    %v728 = vadd.f32 %v727, %v726
    %729 = vst [vmem:[#allocation5] sm:$0xff] %v728
    // Predicated region
    $region14: #{tpu_custom_call.1} parent=1 // pred_check
      _
    $region15: #{tpu_custom_call.1} parent=1 // pred_check_branch
      %731 = sbr.rel (0) target = $region17
    $region16: #{tpu_custom_call.1} parent=1 // pred_region
      %s733 = ssub.s32 128, 128
      %734 = vsyncadd [#allocation4], %s733
      %s736 = sshll.u32 [#allocation5], 4
      %s737 = int_to_ptr.vmem [resolvable:$true] %s736
      %739 = dma.vmem_to_hbm [thread:$0]  %s737, 128, %s1, [#allocation4]
    $region17: #{tpu_custom_call.1} parent=1 // pred_fallthru
      _
    // Predicated region
    $region18: #{tpu_custom_call.1} parent=1 // pred_check
      _
    $region19: #{tpu_custom_call.1} parent=1 // pred_check_branch
      %741 = sbr.rel (0) target = $region21
    $region20: #{tpu_custom_call.1} parent=1 // pred_region
      %742 = dma.done [#allocation4], 128
    $region21: #{tpu_custom_call.1} parent=1 // pred_fallthru
      _
    %743 = vsyncpa [#allocation3], 1
    %744 = vsyncpa [#allocation4], 1

</llo_original>
